<compile_context>
chip_gen: v5e
topology: v5e:2x2
jax: 0.10.0
libtpu: 0.0.40
codegen_flags: <defaults>
</compile_context>

<pallas_src>
import jax
import jax.numpy as jnp
import numpy as np
from jax import lax
from jax.experimental import pallas as pl
from jax.experimental.pallas import tpu as pltpu

BN_EPS = 1e-5  # nn.BatchNorm2d default eps


# ---------------------------------------------------------------------------
# Pallas kernels
# ---------------------------------------------------------------------------
def make_branch_kernel(width, N, H, W, Cin, Cout):
    """Kernel A: `width` dilated 3x3 convs (MXU matmuls on kw-folded, spatially
    flattened inputs), per-branch BatchNorm2d (training batch stats) + PReLU.

    Per-channel BN statistics of the concatenated tensor are identical to
    computing them branch-by-branch (each channel belongs to one branch), so
    the concat is never materialized: branch i writes out_ref[i, n]."""
    HW = H * W

    def kernel(*args):
        a_refs = args[:width]                 # A_i: (N, 3*Cin, (H+2d)*W) VMEM
        wb_ref = args[width]                  # (width*3, Cout, 3*Cin)     VMEM
        g1_ref = args[width + 1]              # (width, Cout, 1)           VMEM
        b1_ref = args[width + 2]              # (width, Cout, 1)           VMEM
        alpha_ref = args[width + 3]           # (1,)                       SMEM
        out_ref = args[width + 4]             # (width, N, Cout, HW)       VMEM

        a = alpha_ref[0]                      # shared PReLU slope
        inv = 1.0 / (N * HW)
        for i in range(width):
            d = 2 * i + 1                     # dilation of branch i
            ys = []
            for n in range(N):
                av = a_refs[i][n, :, :]       # (3*Cin, (H+2d)*W)
                acc = jnp.zeros((Cout, HW), jnp.float32)
                for kh in range(3):
                    patch = av[:, kh * d * W: kh * d * W + HW]   # (3*Cin, HW)
                    acc = acc + jnp.dot(wb_ref[i * 3 + kh], patch,
                                        preferred_element_type=jnp.float32)
                ys.append(acc)                # (Cout, HW), lane-dense
            # BatchNorm (training batch stats) over this branch's channels.
            mean = sum(jnp.sum(y, axis=1, keepdims=True) for y in ys) * inv
            var = sum(jnp.sum((y - mean) ** 2, axis=1, keepdims=True)
                      for y in ys) * inv                         # biased var
            scale = lax.rsqrt(var + BN_EPS) * g1_ref[i]          # (Cout, 1)
            shift = b1_ref[i]
            for n in range(N):
                yn = (ys[n] - mean) * scale + shift
                out_ref[i, n, :, :] = jnp.where(yn >= 0, yn, a * yn)   # PReLU
    return kernel


def make_head_kernel(N, H, W, Cw, Cout):
    """Kernel B: branch1x1 3x3 conv (MXU matmuls, kw-folded input), BatchNorm2d
    (batch stats), residual add with the block input, PReLU."""
    HW = H * W

    def kernel(y_ref, x_ref, wh_ref, g2_ref, b2_ref, alpha_ref, out_ref):
        # y_ref: (N, 3*Cw, (H+2)*W)  x_ref: (N, Cout, HW)
        # wh_ref: (3, Cout, 3*Cw)    g2/b2: (Cout, 1)   alpha: SMEM (1,)
        a = alpha_ref[0]
        inv = 1.0 / (N * HW)
        zs = []
        for n in range(N):
            yv = y_ref[n, :, :]                       # (3*Cw, (H+2)*W)
            acc = jnp.zeros((Cout, HW), jnp.float32)
            for kh in range(3):
                patch = yv[:, kh * W: kh * W + HW]    # (3*Cw, HW)
                acc = acc + jnp.dot(wh_ref[kh], patch,
                                    preferred_element_type=jnp.float32)
            zs.append(acc)
        mean = sum(jnp.sum(z, axis=1, keepdims=True) for z in zs) * inv
        var = sum(jnp.sum((z - mean) ** 2, axis=1, keepdims=True)
                  for z in zs) * inv
        scale = lax.rsqrt(var + BN_EPS) * g2_ref[...]
        shift = b2_ref[...]
        for n in range(N):
            zn = (zs[n] - mean) * scale + shift
            s = zn + x_ref[n, :, :]                   # residual connection
            out_ref[n, :, :] = jnp.where(s >= 0, s, a * s)   # PReLU
    return kernel


# ---------------------------------------------------------------------------
# Wrapper
# ---------------------------------------------------------------------------
def _shift_flatten(padded, pad_total, d, H, W):
    """(N, C, H+2p, W+2p) reflect-padded NCHW -> (N, 3*C, (H+2d)*W): the three
    kw column-shifts (dilation d) are stacked on the channel axis and spatial
    is flattened to rows of exactly W, so every conv tap becomes a contiguous
    lane slice inside the kernel.  Pure wrapper-side layout plumbing."""
    N, C = padded.shape[0], padded.shape[1]
    off = pad_total - d
    blocks = [padded[:, :, off:off + H + 2 * d, off + kw * d: off + kw * d + W]
              for kw in range(3)]
    return jnp.concatenate(blocks, axis=1).reshape(N, 3 * C, (H + 2 * d) * W)


def inception_block_forward(x, params):
    """x: (N, Cin, H, W) float32, NCHW. Returns (N, Cout, H, W)."""
    N, Cin, H, W = x.shape
    branch_ws = params["branch_weights"]               # list of (3,3,Cin,Cout) HWIO
    width = len(branch_ws)
    Cout = branch_ws[0].shape[-1]
    Cw = Cout * width
    assert Cin == Cout, "residual `output + x` requires output_nc == input_nc"
    HW = H * W
    d_max = 2 * width - 1
    x = x.astype(jnp.float32)

    # One reflection pad to the max dilation; per-branch kw-folded flat views.
    xpad = jnp.pad(x, ((0, 0), (0, 0), (d_max, d_max), (d_max, d_max)),
                   mode="reflect")
    a_inputs = [_shift_flatten(xpad, d_max, 2 * i + 1, H, W)
                for i in range(width)]

    # Branch weights: per (branch, kh) a (Cout, 3*Cin) matrix, columns (kw, ci).
    wb = jnp.stack(
        [w.astype(jnp.float32).transpose(0, 3, 1, 2).reshape(3, Cout, 3 * Cin)
         for w in branch_ws], axis=0).reshape(width * 3, Cout, 3 * Cin)
    g1 = params["gamma1"].astype(jnp.float32).reshape(width, Cout, 1)
    b1 = params["beta1"].astype(jnp.float32).reshape(width, Cout, 1)
    alpha = params["alpha"].astype(jnp.float32).reshape(1)

    vmem = pl.BlockSpec(memory_space=pltpu.MemorySpace.VMEM)
    smem = pl.BlockSpec(memory_space=pltpu.MemorySpace.SMEM)

    y_act = pl.pallas_call(
        make_branch_kernel(width, N, H, W, Cin, Cout),
        out_shape=jax.ShapeDtypeStruct((width, N, Cout, HW), jnp.float32),
        in_specs=[vmem] * width + [vmem, vmem, vmem, smem],
        out_specs=vmem,
    )(*a_inputs, wb, g1, b1, alpha)

    # Layout plumbing between stages: channel-major NCHW, reflect pad 1,
    # kw-fold + flatten for the head conv.
    y_nchw = y_act.transpose(1, 0, 2, 3).reshape(N, Cw, H, W)
    ypad = jnp.pad(y_nchw, ((0, 0), (0, 0), (1, 1), (1, 1)), mode="reflect")
    y_in = _shift_flatten(ypad, 1, 1, H, W)            # (N, 3*Cw, (H+2)*W)

    wh = params["w_1x1"].astype(jnp.float32).transpose(0, 3, 1, 2)
    wh = wh.reshape(3, Cout, 3 * Cw)                   # per-kh (Cout, 3*Cw)
    g2 = params["gamma2"].astype(jnp.float32).reshape(Cout, 1)
    b2 = params["beta2"].astype(jnp.float32).reshape(Cout, 1)

    out = pl.pallas_call(
        make_head_kernel(N, H, W, Cw, Cout),
        out_shape=jax.ShapeDtypeStruct((N, Cout, HW), jnp.float32),
        in_specs=[vmem, vmem, vmem, vmem, vmem, smem],
        out_specs=vmem,
    )(y_in, x.reshape(N, Cin, HW), wh, g2, b2, alpha)

    return out.reshape(N, Cout, H, W)


# ---------------------------------------------------------------------------
# Pure-JAX reference (independent of the kernel math, uses lax.conv)
# ---------------------------------------------------------------------------
def _bn_train(y, gamma, beta):
    mean = jnp.mean(y, axis=(0, 2, 3), keepdims=True)
    var = jnp.mean((y - mean) ** 2, axis=(0, 2, 3), keepdims=True)
    return ((y - mean) * lax.rsqrt(var + BN_EPS)
            * gamma.reshape(1, -1, 1, 1) + beta.reshape(1, -1, 1, 1))


def reference_forward(x, params):
    x = x.astype(jnp.float32)
    width = len(params["branch_weights"])
    a = params["alpha"][0]
    outs = []
    for i in range(width):
        d = 2 * i + 1
        xpad = jnp.pad(x, ((0, 0), (0, 0), (d, d), (d, d)), mode="reflect")
        outs.append(lax.conv_general_dilated(
            xpad, params["branch_weights"][i], (1, 1), "VALID",
            rhs_dilation=(d, d), dimension_numbers=("NCHW", "HWIO", "NCHW")))
    y = jnp.concatenate(outs, axis=1)
    y = _bn_train(y, params["gamma1"], params["beta1"])
    y = jnp.where(y >= 0, y, a * y)
    ypad = jnp.pad(y, ((0, 0), (0, 0), (1, 1), (1, 1)), mode="reflect")
    z = lax.conv_general_dilated(
        ypad, params["w_1x1"], (1, 1), "VALID",
        dimension_numbers=("NCHW", "HWIO", "NCHW"))
    z = _bn_train(z, params["gamma2"], params["beta2"])
    s = z + x
    return jnp.where(s >= 0, s, a * s)


# ---------------------------------------------------------------------------
if __name__ == "__main__":
    key = jax.random.PRNGKey(0)
    N, Cin, H, W = 2, 4, 16, 16
    output_nc = Cin          # residual `output + x` requires output_nc == input_nc
    width = 2
    Cw = output_nc * width

    keys = jax.random.split(key, 8)
    branch_weights = [
        0.1 * jax.random.normal(keys[i], (3, 3, Cin, output_nc), jnp.float32)
        for i in range(width)
    ]
    params = {
        "branch_weights": branch_weights,                                   # Conv2d, bias=False
        "w_1x1": 0.1 * jax.random.normal(keys[2], (3, 3, Cw, output_nc), jnp.float32),
        "gamma1": 1.0 + 0.1 * jax.random.normal(keys[4], (Cw,), jnp.float32),
        "beta1": 0.1 * jax.random.normal(keys[5], (Cw,), jnp.float32),
        "gamma2": 1.0 + 0.1 * jax.random.normal(keys[6], (output_nc,), jnp.float32),
        "beta2": 0.05 * jnp.ones((output_nc,), jnp.float32),
        "alpha": jnp.array([0.25], jnp.float32),                            # nn.PReLU() default
    }
    x = jax.random.normal(keys[3], (N, Cin, H, W), jnp.float32)

    out = jax.jit(inception_block_forward)(x, params)
    out = jax.block_until_ready(out)

    ref = reference_forward(x, params)
    np.testing.assert_allclose(np.asarray(out), np.asarray(ref), rtol=1e-3, atol=1e-3)
    print("KERNEL_OK")
</pallas_src>

<mosaic_0001>
module attributes {stable_mosaic.version = 11 : i64} {
  func.func @kernel(%arg0: memref<2x12x288xf32, #tpu.memory_space<vmem>>, %arg1: memref<2x12x352xf32, #tpu.memory_space<vmem>>, %arg2: memref<6x4x12xf32, #tpu.memory_space<vmem>>, %arg3: memref<2x4x1xf32, #tpu.memory_space<vmem>>, %arg4: memref<2x4x1xf32, #tpu.memory_space<vmem>>, %arg5: memref<1xf32, #tpu.memory_space<smem>>, %arg6: memref<2x2x4x256xf32, #tpu.memory_space<vmem>>) attributes {dimension_semantics = [], scalar_prefetch = 0 : i64, scratch_operands = 0 : i64, tpu.core_type = #tpu.core_type<tc>} {
    %c0 = arith.constant 0 : index
    %0 = memref.load %arg5[%c0] : memref<1xf32, #tpu.memory_space<smem>>
    %c0_0 = arith.constant 0 : index
    %c0_1 = arith.constant 0 : index
    %c0_2 = arith.constant 0 : index
    %1 = vector.load %arg0[%c0_0, %c0_1, %c0_2] : memref<2x12x288xf32, #tpu.memory_space<vmem>>, vector<1x12x288xf32>
    %2 = vector.shape_cast %1 : vector<1x12x288xf32> to vector<12x288xf32>
    %cst = arith.constant 0.000000e+00 : f32
    %3 = vector.broadcast %cst : f32 to vector<4x256xf32>
    %4 = vector.extract_strided_slice %2 {offsets = [0, 0], sizes = [12, 256], strides = [1, 1]} : vector<12x288xf32> to vector<12x256xf32>
    %c0_3 = arith.constant 0 : index
    %c0_4 = arith.constant 0 : index
    %c0_5 = arith.constant 0 : index
    %5 = vector.load %arg2[%c0_3, %c0_4, %c0_5] : memref<6x4x12xf32, #tpu.memory_space<vmem>>, vector<1x4x12xf32>
    %6 = vector.shape_cast %5 : vector<1x4x12xf32> to vector<4x12xf32>
    %cst_6 = arith.constant dense<0.000000e+00> : vector<4x256xf32>
    %7 = tpu.matmul %6, %4, %cst_6 {dimension_numbers = #tpu.dot_dimension_numbers<[1], [0], [0], [1], [0, 0, 1, 1], [], []>} : vector<4x12xf32>, vector<12x256xf32>, vector<4x256xf32> -> vector<4x256xf32>
    %8 = arith.addf %3, %7 : vector<4x256xf32>
    %9 = vector.extract_strided_slice %2 {offsets = [0, 16], sizes = [12, 256], strides = [1, 1]} : vector<12x288xf32> to vector<12x256xf32>
    %c1 = arith.constant 1 : index
    %c0_7 = arith.constant 0 : index
    %c0_8 = arith.constant 0 : index
    %10 = vector.load %arg2[%c1, %c0_7, %c0_8] : memref<6x4x12xf32, #tpu.memory_space<vmem>>, vector<1x4x12xf32>
    %11 = vector.shape_cast %10 : vector<1x4x12xf32> to vector<4x12xf32>
    %cst_9 = arith.constant dense<0.000000e+00> : vector<4x256xf32>
    %12 = tpu.matmul %11, %9, %cst_9 {dimension_numbers = #tpu.dot_dimension_numbers<[1], [0], [0], [1], [0, 0, 1, 1], [], []>} : vector<4x12xf32>, vector<12x256xf32>, vector<4x256xf32> -> vector<4x256xf32>
    %13 = arith.addf %8, %12 : vector<4x256xf32>
    %14 = vector.extract_strided_slice %2 {offsets = [0, 32], sizes = [12, 256], strides = [1, 1]} : vector<12x288xf32> to vector<12x256xf32>
    %c2 = arith.constant 2 : index
    %c0_10 = arith.constant 0 : index
    %c0_11 = arith.constant 0 : index
    %15 = vector.load %arg2[%c2, %c0_10, %c0_11] : memref<6x4x12xf32, #tpu.memory_space<vmem>>, vector<1x4x12xf32>
    %16 = vector.shape_cast %15 : vector<1x4x12xf32> to vector<4x12xf32>
    %cst_12 = arith.constant dense<0.000000e+00> : vector<4x256xf32>
    %17 = tpu.matmul %16, %14, %cst_12 {dimension_numbers = #tpu.dot_dimension_numbers<[1], [0], [0], [1], [0, 0, 1, 1], [], []>} : vector<4x12xf32>, vector<12x256xf32>, vector<4x256xf32> -> vector<4x256xf32>
    %18 = arith.addf %13, %17 : vector<4x256xf32>
    %c1_13 = arith.constant 1 : index
    %c0_14 = arith.constant 0 : index
    %c0_15 = arith.constant 0 : index
    %19 = vector.load %arg0[%c1_13, %c0_14, %c0_15] : memref<2x12x288xf32, #tpu.memory_space<vmem>>, vector<1x12x288xf32>
    %20 = vector.shape_cast %19 : vector<1x12x288xf32> to vector<12x288xf32>
    %cst_16 = arith.constant 0.000000e+00 : f32
    %21 = vector.broadcast %cst_16 : f32 to vector<4x256xf32>
    %22 = vector.extract_strided_slice %20 {offsets = [0, 0], sizes = [12, 256], strides = [1, 1]} : vector<12x288xf32> to vector<12x256xf32>
    %c0_17 = arith.constant 0 : index
    %c0_18 = arith.constant 0 : index
    %c0_19 = arith.constant 0 : index
    %23 = vector.load %arg2[%c0_17, %c0_18, %c0_19] : memref<6x4x12xf32, #tpu.memory_space<vmem>>, vector<1x4x12xf32>
    %24 = vector.shape_cast %23 : vector<1x4x12xf32> to vector<4x12xf32>
    %cst_20 = arith.constant dense<0.000000e+00> : vector<4x256xf32>
    %25 = tpu.matmul %24, %22, %cst_20 {dimension_numbers = #tpu.dot_dimension_numbers<[1], [0], [0], [1], [0, 0, 1, 1], [], []>} : vector<4x12xf32>, vector<12x256xf32>, vector<4x256xf32> -> vector<4x256xf32>
    %26 = arith.addf %21, %25 : vector<4x256xf32>
    %27 = vector.extract_strided_slice %20 {offsets = [0, 16], sizes = [12, 256], strides = [1, 1]} : vector<12x288xf32> to vector<12x256xf32>
    %c1_21 = arith.constant 1 : index
    %c0_22 = arith.constant 0 : index
    %c0_23 = arith.constant 0 : index
    %28 = vector.load %arg2[%c1_21, %c0_22, %c0_23] : memref<6x4x12xf32, #tpu.memory_space<vmem>>, vector<1x4x12xf32>
    %29 = vector.shape_cast %28 : vector<1x4x12xf32> to vector<4x12xf32>
    %cst_24 = arith.constant dense<0.000000e+00> : vector<4x256xf32>
    %30 = tpu.matmul %29, %27, %cst_24 {dimension_numbers = #tpu.dot_dimension_numbers<[1], [0], [0], [1], [0, 0, 1, 1], [], []>} : vector<4x12xf32>, vector<12x256xf32>, vector<4x256xf32> -> vector<4x256xf32>
    %31 = arith.addf %26, %30 : vector<4x256xf32>
    %32 = vector.extract_strided_slice %20 {offsets = [0, 32], sizes = [12, 256], strides = [1, 1]} : vector<12x288xf32> to vector<12x256xf32>
    %c2_25 = arith.constant 2 : index
    %c0_26 = arith.constant 0 : index
    %c0_27 = arith.constant 0 : index
    %33 = vector.load %arg2[%c2_25, %c0_26, %c0_27] : memref<6x4x12xf32, #tpu.memory_space<vmem>>, vector<1x4x12xf32>
    %34 = vector.shape_cast %33 : vector<1x4x12xf32> to vector<4x12xf32>
    %cst_28 = arith.constant dense<0.000000e+00> : vector<4x256xf32>
    %35 = tpu.matmul %34, %32, %cst_28 {dimension_numbers = #tpu.dot_dimension_numbers<[1], [0], [0], [1], [0, 0, 1, 1], [], []>} : vector<4x12xf32>, vector<12x256xf32>, vector<4x256xf32> -> vector<4x256xf32>
    %36 = arith.addf %31, %35 : vector<4x256xf32>
    %cst_29 = arith.constant dense<0.000000e+00> : vector<4xf32>
    %37 = vector.multi_reduction <add>, %18, %cst_29 [1] : vector<4x256xf32> to vector<4xf32>
    %38 = vector.shape_cast %37 : vector<4xf32> to vector<4x1xf32>
    %cst_30 = arith.constant 0.000000e+00 : f32
    %39 = vector.broadcast %cst_30 : f32 to vector<4x1xf32>
    %40 = arith.addf %39, %38 : vector<4x1xf32>
    %cst_31 = arith.constant dense<0.000000e+00> : vector<4xf32>
    %41 = vector.multi_reduction <add>, %36, %cst_31 [1] : vector<4x256xf32> to vector<4xf32>
    %42 = vector.shape_cast %41 : vector<4xf32> to vector<4x1xf32>
    %43 = arith.addf %40, %42 : vector<4x1xf32>
    %cst_32 = arith.constant 0.001953125 : f32
    %44 = vector.broadcast %cst_32 : f32 to vector<4x1xf32>
    %45 = arith.mulf %43, %44 : vector<4x1xf32>
    %46 = vector.broadcast %45 : vector<4x1xf32> to vector<4x256xf32>
    %47 = arith.subf %18, %46 : vector<4x256xf32>
    %48 = arith.mulf %47, %47 : vector<4x256xf32>
    %cst_33 = arith.constant dense<0.000000e+00> : vector<4xf32>
    %49 = vector.multi_reduction <add>, %48, %cst_33 [1] : vector<4x256xf32> to vector<4xf32>
    %50 = vector.shape_cast %49 : vector<4xf32> to vector<4x1xf32>
    %cst_34 = arith.constant 0.000000e+00 : f32
    %51 = vector.broadcast %cst_34 : f32 to vector<4x1xf32>
    %52 = arith.addf %51, %50 : vector<4x1xf32>
    %53 = vector.broadcast %45 : vector<4x1xf32> to vector<4x256xf32>
    %54 = arith.subf %36, %53 : vector<4x256xf32>
    %55 = arith.mulf %54, %54 : vector<4x256xf32>
    %cst_35 = arith.constant dense<0.000000e+00> : vector<4xf32>
    %56 = vector.multi_reduction <add>, %55, %cst_35 [1] : vector<4x256xf32> to vector<4xf32>
    %57 = vector.shape_cast %56 : vector<4xf32> to vector<4x1xf32>
    %58 = arith.addf %52, %57 : vector<4x1xf32>
    %cst_36 = arith.constant 0.001953125 : f32
    %59 = vector.broadcast %cst_36 : f32 to vector<4x1xf32>
    %60 = arith.mulf %58, %59 : vector<4x1xf32>
    %cst_37 = arith.constant 9.99999974E-6 : f32
    %61 = vector.broadcast %cst_37 : f32 to vector<4x1xf32>
    %62 = arith.addf %60, %61 : vector<4x1xf32>
    %63 = math.rsqrt %62 : vector<4x1xf32>
    %c0_38 = arith.constant 0 : index
    %c0_39 = arith.constant 0 : index
    %c0_40 = arith.constant 0 : index
    %64 = vector.load %arg3[%c0_38, %c0_39, %c0_40] : memref<2x4x1xf32, #tpu.memory_space<vmem>>, vector<1x4x1xf32>
    %65 = vector.shape_cast %64 : vector<1x4x1xf32> to vector<4x1xf32>
    %66 = arith.mulf %63, %65 : vector<4x1xf32>
    %c0_41 = arith.constant 0 : index
    %c0_42 = arith.constant 0 : index
    %c0_43 = arith.constant 0 : index
    %67 = vector.load %arg4[%c0_41, %c0_42, %c0_43] : memref<2x4x1xf32, #tpu.memory_space<vmem>>, vector<1x4x1xf32>
    %68 = vector.shape_cast %67 : vector<1x4x1xf32> to vector<4x1xf32>
    %69 = vector.broadcast %45 : vector<4x1xf32> to vector<4x256xf32>
    %70 = arith.subf %18, %69 : vector<4x256xf32>
    %71 = vector.broadcast %66 : vector<4x1xf32> to vector<4x256xf32>
    %72 = arith.mulf %70, %71 : vector<4x256xf32>
    %73 = vector.broadcast %68 : vector<4x1xf32> to vector<4x256xf32>
    %74 = arith.addf %72, %73 : vector<4x256xf32>
    %cst_44 = arith.constant 0.000000e+00 : f32
    %75 = vector.broadcast %cst_44 : f32 to vector<4x256xf32>
    %76 = arith.cmpf oge, %74, %75 : vector<4x256xf32>
    %77 = vector.broadcast %0 : f32 to vector<4x256xf32>
    %78 = arith.mulf %77, %74 : vector<4x256xf32>
    %79 = arith.select %76, %74, %78 : vector<4x256xi1>, vector<4x256xf32>
    %c0_45 = arith.constant 0 : index
    %c0_46 = arith.constant 0 : index
    %c0_47 = arith.constant 0 : index
    %c0_48 = arith.constant 0 : index
    %80 = vector.load %arg6[%c0_45, %c0_46, %c0_47, %c0_48] : memref<2x2x4x256xf32, #tpu.memory_space<vmem>>, vector<1x1x4x256xf32>
    %81 = vector.shape_cast %80 : vector<1x1x4x256xf32> to vector<4x256xf32>
    %82 = vector.shape_cast %79 : vector<4x256xf32> to vector<1x1x4x256xf32>
    tpu.vector_store %arg6[%c0_45, %c0_46, %c0_47, %c0_48], %82 {strides = array<i32>} : memref<2x2x4x256xf32, #tpu.memory_space<vmem>>, vector<1x1x4x256xf32>,
    %83 = vector.broadcast %45 : vector<4x1xf32> to vector<4x256xf32>
    %84 = arith.subf %36, %83 : vector<4x256xf32>
    %85 = vector.broadcast %66 : vector<4x1xf32> to vector<4x256xf32>
    %86 = arith.mulf %84, %85 : vector<4x256xf32>
    %87 = vector.broadcast %68 : vector<4x1xf32> to vector<4x256xf32>
    %88 = arith.addf %86, %87 : vector<4x256xf32>
    %cst_49 = arith.constant 0.000000e+00 : f32
    %89 = vector.broadcast %cst_49 : f32 to vector<4x256xf32>
    %90 = arith.cmpf oge, %88, %89 : vector<4x256xf32>
    %91 = vector.broadcast %0 : f32 to vector<4x256xf32>
    %92 = arith.mulf %91, %88 : vector<4x256xf32>
    %93 = arith.select %90, %88, %92 : vector<4x256xi1>, vector<4x256xf32>
    %c0_50 = arith.constant 0 : index
    %c1_51 = arith.constant 1 : index
    %c0_52 = arith.constant 0 : index
    %c0_53 = arith.constant 0 : index
    %94 = vector.load %arg6[%c0_50, %c1_51, %c0_52, %c0_53] : memref<2x2x4x256xf32, #tpu.memory_space<vmem>>, vector<1x1x4x256xf32>
    %95 = vector.shape_cast %94 : vector<1x1x4x256xf32> to vector<4x256xf32>
    %96 = vector.shape_cast %93 : vector<4x256xf32> to vector<1x1x4x256xf32>
    tpu.vector_store %arg6[%c0_50, %c1_51, %c0_52, %c0_53], %96 {strides = array<i32>} : memref<2x2x4x256xf32, #tpu.memory_space<vmem>>, vector<1x1x4x256xf32>,
    %c0_54 = arith.constant 0 : index
    %c0_55 = arith.constant 0 : index
    %c0_56 = arith.constant 0 : index
    %97 = vector.load %arg1[%c0_54, %c0_55, %c0_56] : memref<2x12x352xf32, #tpu.memory_space<vmem>>, vector<1x12x352xf32>
    %98 = vector.shape_cast %97 : vector<1x12x352xf32> to vector<12x352xf32>
    %cst_57 = arith.constant 0.000000e+00 : f32
    %99 = vector.broadcast %cst_57 : f32 to vector<4x256xf32>
    %100 = vector.extract_strided_slice %98 {offsets = [0, 0], sizes = [12, 256], strides = [1, 1]} : vector<12x352xf32> to vector<12x256xf32>
    %c3 = arith.constant 3 : index
    %c0_58 = arith.constant 0 : index
    %c0_59 = arith.constant 0 : index
    %101 = vector.load %arg2[%c3, %c0_58, %c0_59] : memref<6x4x12xf32, #tpu.memory_space<vmem>>, vector<1x4x12xf32>
    %102 = vector.shape_cast %101 : vector<1x4x12xf32> to vector<4x12xf32>
    %cst_60 = arith.constant dense<0.000000e+00> : vector<4x256xf32>
    %103 = tpu.matmul %102, %100, %cst_60 {dimension_numbers = #tpu.dot_dimension_numbers<[1], [0], [0], [1], [0, 0, 1, 1], [], []>} : vector<4x12xf32>, vector<12x256xf32>, vector<4x256xf32> -> vector<4x256xf32>
    %104 = arith.addf %99, %103 : vector<4x256xf32>
    %105 = vector.extract_strided_slice %98 {offsets = [0, 48], sizes = [12, 256], strides = [1, 1]} : vector<12x352xf32> to vector<12x256xf32>
    %c4 = arith.constant 4 : index
    %c0_61 = arith.constant 0 : index
    %c0_62 = arith.constant 0 : index
    %106 = vector.load %arg2[%c4, %c0_61, %c0_62] : memref<6x4x12xf32, #tpu.memory_space<vmem>>, vector<1x4x12xf32>
    %107 = vector.shape_cast %106 : vector<1x4x12xf32> to vector<4x12xf32>
    %cst_63 = arith.constant dense<0.000000e+00> : vector<4x256xf32>
    %108 = tpu.matmul %107, %105, %cst_63 {dimension_numbers = #tpu.dot_dimension_numbers<[1], [0], [0], [1], [0, 0, 1, 1], [], []>} : vector<4x12xf32>, vector<12x256xf32>, vector<4x256xf32> -> vector<4x256xf32>
    %109 = arith.addf %104, %108 : vector<4x256xf32>
    %110 = vector.extract_strided_slice %98 {offsets = [0, 96], sizes = [12, 256], strides = [1, 1]} : vector<12x352xf32> to vector<12x256xf32>
    %c5 = arith.constant 5 : index
    %c0_64 = arith.constant 0 : index
    %c0_65 = arith.constant 0 : index
    %111 = vector.load %arg2[%c5, %c0_64, %c0_65] : memref<6x4x12xf32, #tpu.memory_space<vmem>>, vector<1x4x12xf32>
    %112 = vector.shape_cast %111 : vector<1x4x12xf32> to vector<4x12xf32>
    %cst_66 = arith.constant dense<0.000000e+00> : vector<4x256xf32>
    %113 = tpu.matmul %112, %110, %cst_66 {dimension_numbers = #tpu.dot_dimension_numbers<[1], [0], [0], [1], [0, 0, 1, 1], [], []>} : vector<4x12xf32>, vector<12x256xf32>, vector<4x256xf32> -> vector<4x256xf32>
    %114 = arith.addf %109, %113 : vector<4x256xf32>
    %c1_67 = arith.constant 1 : index
    %c0_68 = arith.constant 0 : index
    %c0_69 = arith.constant 0 : index
    %115 = vector.load %arg1[%c1_67, %c0_68, %c0_69] : memref<2x12x352xf32, #tpu.memory_space<vmem>>, vector<1x12x352xf32>
    %116 = vector.shape_cast %115 : vector<1x12x352xf32> to vector<12x352xf32>
    %cst_70 = arith.constant 0.000000e+00 : f32
    %117 = vector.broadcast %cst_70 : f32 to vector<4x256xf32>
    %118 = vector.extract_strided_slice %116 {offsets = [0, 0], sizes = [12, 256], strides = [1, 1]} : vector<12x352xf32> to vector<12x256xf32>
    %c3_71 = arith.constant 3 : index
    %c0_72 = arith.constant 0 : index
    %c0_73 = arith.constant 0 : index
    %119 = vector.load %arg2[%c3_71, %c0_72, %c0_73] : memref<6x4x12xf32, #tpu.memory_space<vmem>>, vector<1x4x12xf32>
    %120 = vector.shape_cast %119 : vector<1x4x12xf32> to vector<4x12xf32>
    %cst_74 = arith.constant dense<0.000000e+00> : vector<4x256xf32>
    %121 = tpu.matmul %120, %118, %cst_74 {dimension_numbers = #tpu.dot_dimension_numbers<[1], [0], [0], [1], [0, 0, 1, 1], [], []>} : vector<4x12xf32>, vector<12x256xf32>, vector<4x256xf32> -> vector<4x256xf32>
    %122 = arith.addf %117, %121 : vector<4x256xf32>
    %123 = vector.extract_strided_slice %116 {offsets = [0, 48], sizes = [12, 256], strides = [1, 1]} : vector<12x352xf32> to vector<12x256xf32>
    %c4_75 = arith.constant 4 : index
    %c0_76 = arith.constant 0 : index
    %c0_77 = arith.constant 0 : index
    %124 = vector.load %arg2[%c4_75, %c0_76, %c0_77] : memref<6x4x12xf32, #tpu.memory_space<vmem>>, vector<1x4x12xf32>
    %125 = vector.shape_cast %124 : vector<1x4x12xf32> to vector<4x12xf32>
    %cst_78 = arith.constant dense<0.000000e+00> : vector<4x256xf32>
    %126 = tpu.matmul %125, %123, %cst_78 {dimension_numbers = #tpu.dot_dimension_numbers<[1], [0], [0], [1], [0, 0, 1, 1], [], []>} : vector<4x12xf32>, vector<12x256xf32>, vector<4x256xf32> -> vector<4x256xf32>
    %127 = arith.addf %122, %126 : vector<4x256xf32>
    %128 = vector.extract_strided_slice %116 {offsets = [0, 96], sizes = [12, 256], strides = [1, 1]} : vector<12x352xf32> to vector<12x256xf32>
    %c5_79 = arith.constant 5 : index
    %c0_80 = arith.constant 0 : index
    %c0_81 = arith.constant 0 : index
    %129 = vector.load %arg2[%c5_79, %c0_80, %c0_81] : memref<6x4x12xf32, #tpu.memory_space<vmem>>, vector<1x4x12xf32>
    %130 = vector.shape_cast %129 : vector<1x4x12xf32> to vector<4x12xf32>
    %cst_82 = arith.constant dense<0.000000e+00> : vector<4x256xf32>
    %131 = tpu.matmul %130, %128, %cst_82 {dimension_numbers = #tpu.dot_dimension_numbers<[1], [0], [0], [1], [0, 0, 1, 1], [], []>} : vector<4x12xf32>, vector<12x256xf32>, vector<4x256xf32> -> vector<4x256xf32>
    %132 = arith.addf %127, %131 : vector<4x256xf32>
    %cst_83 = arith.constant dense<0.000000e+00> : vector<4xf32>
    %133 = vector.multi_reduction <add>, %114, %cst_83 [1] : vector<4x256xf32> to vector<4xf32>
    %134 = vector.shape_cast %133 : vector<4xf32> to vector<4x1xf32>
    %cst_84 = arith.constant 0.000000e+00 : f32
    %135 = vector.broadcast %cst_84 : f32 to vector<4x1xf32>
    %136 = arith.addf %135, %134 : vector<4x1xf32>
    %cst_85 = arith.constant dense<0.000000e+00> : vector<4xf32>
    %137 = vector.multi_reduction <add>, %132, %cst_85 [1] : vector<4x256xf32> to vector<4xf32>
    %138 = vector.shape_cast %137 : vector<4xf32> to vector<4x1xf32>
    %139 = arith.addf %136, %138 : vector<4x1xf32>
    %cst_86 = arith.constant 0.001953125 : f32
    %140 = vector.broadcast %cst_86 : f32 to vector<4x1xf32>
    %141 = arith.mulf %139, %140 : vector<4x1xf32>
    %142 = vector.broadcast %141 : vector<4x1xf32> to vector<4x256xf32>
    %143 = arith.subf %114, %142 : vector<4x256xf32>
    %144 = arith.mulf %143, %143 : vector<4x256xf32>
    %cst_87 = arith.constant dense<0.000000e+00> : vector<4xf32>
    %145 = vector.multi_reduction <add>, %144, %cst_87 [1] : vector<4x256xf32> to vector<4xf32>
    %146 = vector.shape_cast %145 : vector<4xf32> to vector<4x1xf32>
    %cst_88 = arith.constant 0.000000e+00 : f32
    %147 = vector.broadcast %cst_88 : f32 to vector<4x1xf32>
    %148 = arith.addf %147, %146 : vector<4x1xf32>
    %149 = vector.broadcast %141 : vector<4x1xf32> to vector<4x256xf32>
    %150 = arith.subf %132, %149 : vector<4x256xf32>
    %151 = arith.mulf %150, %150 : vector<4x256xf32>
    %cst_89 = arith.constant dense<0.000000e+00> : vector<4xf32>
    %152 = vector.multi_reduction <add>, %151, %cst_89 [1] : vector<4x256xf32> to vector<4xf32>
    %153 = vector.shape_cast %152 : vector<4xf32> to vector<4x1xf32>
    %154 = arith.addf %148, %153 : vector<4x1xf32>
    %cst_90 = arith.constant 0.001953125 : f32
    %155 = vector.broadcast %cst_90 : f32 to vector<4x1xf32>
    %156 = arith.mulf %154, %155 : vector<4x1xf32>
    %cst_91 = arith.constant 9.99999974E-6 : f32
    %157 = vector.broadcast %cst_91 : f32 to vector<4x1xf32>
    %158 = arith.addf %156, %157 : vector<4x1xf32>
    %159 = math.rsqrt %158 : vector<4x1xf32>
    %c1_92 = arith.constant 1 : index
    %c0_93 = arith.constant 0 : index
    %c0_94 = arith.constant 0 : index
    %160 = vector.load %arg3[%c1_92, %c0_93, %c0_94] : memref<2x4x1xf32, #tpu.memory_space<vmem>>, vector<1x4x1xf32>
    %161 = vector.shape_cast %160 : vector<1x4x1xf32> to vector<4x1xf32>
    %162 = arith.mulf %159, %161 : vector<4x1xf32>
    %c1_95 = arith.constant 1 : index
    %c0_96 = arith.constant 0 : index
    %c0_97 = arith.constant 0 : index
    %163 = vector.load %arg4[%c1_95, %c0_96, %c0_97] : memref<2x4x1xf32, #tpu.memory_space<vmem>>, vector<1x4x1xf32>
    %164 = vector.shape_cast %163 : vector<1x4x1xf32> to vector<4x1xf32>
    %165 = vector.broadcast %141 : vector<4x1xf32> to vector<4x256xf32>
    %166 = arith.subf %114, %165 : vector<4x256xf32>
    %167 = vector.broadcast %162 : vector<4x1xf32> to vector<4x256xf32>
    %168 = arith.mulf %166, %167 : vector<4x256xf32>
    %169 = vector.broadcast %164 : vector<4x1xf32> to vector<4x256xf32>
    %170 = arith.addf %168, %169 : vector<4x256xf32>
    %cst_98 = arith.constant 0.000000e+00 : f32
    %171 = vector.broadcast %cst_98 : f32 to vector<4x256xf32>
    %172 = arith.cmpf oge, %170, %171 : vector<4x256xf32>
    %173 = vector.broadcast %0 : f32 to vector<4x256xf32>
    %174 = arith.mulf %173, %170 : vector<4x256xf32>
    %175 = arith.select %172, %170, %174 : vector<4x256xi1>, vector<4x256xf32>
    %c1_99 = arith.constant 1 : index
    %c0_100 = arith.constant 0 : index
    %c0_101 = arith.constant 0 : index
    %c0_102 = arith.constant 0 : index
    %176 = vector.load %arg6[%c1_99, %c0_100, %c0_101, %c0_102] : memref<2x2x4x256xf32, #tpu.memory_space<vmem>>, vector<1x1x4x256xf32>
    %177 = vector.shape_cast %176 : vector<1x1x4x256xf32> to vector<4x256xf32>
    %178 = vector.shape_cast %175 : vector<4x256xf32> to vector<1x1x4x256xf32>
    tpu.vector_store %arg6[%c1_99, %c0_100, %c0_101, %c0_102], %178 {strides = array<i32>} : memref<2x2x4x256xf32, #tpu.memory_space<vmem>>, vector<1x1x4x256xf32>,
    %179 = vector.broadcast %141 : vector<4x1xf32> to vector<4x256xf32>
    %180 = arith.subf %132, %179 : vector<4x256xf32>
    %181 = vector.broadcast %162 : vector<4x1xf32> to vector<4x256xf32>
    %182 = arith.mulf %180, %181 : vector<4x256xf32>
    %183 = vector.broadcast %164 : vector<4x1xf32> to vector<4x256xf32>
    %184 = arith.addf %182, %183 : vector<4x256xf32>
    %cst_103 = arith.constant 0.000000e+00 : f32
    %185 = vector.broadcast %cst_103 : f32 to vector<4x256xf32>
    %186 = arith.cmpf oge, %184, %185 : vector<4x256xf32>
    %187 = vector.broadcast %0 : f32 to vector<4x256xf32>
    %188 = arith.mulf %187, %184 : vector<4x256xf32>
    %189 = arith.select %186, %184, %188 : vector<4x256xi1>, vector<4x256xf32>
    %c1_104 = arith.constant 1 : index
    %c1_105 = arith.constant 1 : index
    %c0_106 = arith.constant 0 : index
    %c0_107 = arith.constant 0 : index
    %190 = vector.load %arg6[%c1_104, %c1_105, %c0_106, %c0_107] : memref<2x2x4x256xf32, #tpu.memory_space<vmem>>, vector<1x1x4x256xf32>
    %191 = vector.shape_cast %190 : vector<1x1x4x256xf32> to vector<4x256xf32>
    %192 = vector.shape_cast %189 : vector<4x256xf32> to vector<1x1x4x256xf32>
    tpu.vector_store %arg6[%c1_104, %c1_105, %c0_106, %c0_107], %192 {strides = array<i32>} : memref<2x2x4x256xf32, #tpu.memory_space<vmem>>, vector<1x1x4x256xf32>,
    return
  }
}

module attributes {stable_mosaic.version = 11 : i64} {
  func.func @kernel(%arg0: memref<2x24x288xf32, #tpu.memory_space<vmem>>, %arg1: memref<2x4x256xf32, #tpu.memory_space<vmem>>, %arg2: memref<3x4x24xf32, #tpu.memory_space<vmem>>, %arg3: memref<4x1xf32, #tpu.memory_space<vmem>>, %arg4: memref<4x1xf32, #tpu.memory_space<vmem>>, %arg5: memref<1xf32, #tpu.memory_space<smem>>, %arg6: memref<2x4x256xf32, #tpu.memory_space<vmem>>) attributes {dimension_semantics = [], scalar_prefetch = 0 : i64, scratch_operands = 0 : i64, tpu.core_type = #tpu.core_type<tc>} {
    %c0 = arith.constant 0 : index
    %0 = memref.load %arg5[%c0] : memref<1xf32, #tpu.memory_space<smem>>
    %c0_0 = arith.constant 0 : index
    %c0_1 = arith.constant 0 : index
    %c0_2 = arith.constant 0 : index
    %1 = vector.load %arg0[%c0_0, %c0_1, %c0_2] : memref<2x24x288xf32, #tpu.memory_space<vmem>>, vector<1x24x288xf32>
    %2 = vector.shape_cast %1 : vector<1x24x288xf32> to vector<24x288xf32>
    %cst = arith.constant 0.000000e+00 : f32
    %3 = vector.broadcast %cst : f32 to vector<4x256xf32>
    %4 = vector.extract_strided_slice %2 {offsets = [0, 0], sizes = [24, 256], strides = [1, 1]} : vector<24x288xf32> to vector<24x256xf32>
    %c0_3 = arith.constant 0 : index
    %c0_4 = arith.constant 0 : index
    %c0_5 = arith.constant 0 : index
    %5 = vector.load %arg2[%c0_3, %c0_4, %c0_5] : memref<3x4x24xf32, #tpu.memory_space<vmem>>, vector<1x4x24xf32>
    %6 = vector.shape_cast %5 : vector<1x4x24xf32> to vector<4x24xf32>
    %cst_6 = arith.constant dense<0.000000e+00> : vector<4x256xf32>
    %7 = tpu.matmul %6, %4, %cst_6 {dimension_numbers = #tpu.dot_dimension_numbers<[1], [0], [0], [1], [0, 0, 1, 1], [], []>} : vector<4x24xf32>, vector<24x256xf32>, vector<4x256xf32> -> vector<4x256xf32>
    %8 = arith.addf %3, %7 : vector<4x256xf32>
    %9 = vector.extract_strided_slice %2 {offsets = [0, 16], sizes = [24, 256], strides = [1, 1]} : vector<24x288xf32> to vector<24x256xf32>
    %c1 = arith.constant 1 : index
    %c0_7 = arith.constant 0 : index
    %c0_8 = arith.constant 0 : index
    %10 = vector.load %arg2[%c1, %c0_7, %c0_8] : memref<3x4x24xf32, #tpu.memory_space<vmem>>, vector<1x4x24xf32>
    %11 = vector.shape_cast %10 : vector<1x4x24xf32> to vector<4x24xf32>
    %cst_9 = arith.constant dense<0.000000e+00> : vector<4x256xf32>
    %12 = tpu.matmul %11, %9, %cst_9 {dimension_numbers = #tpu.dot_dimension_numbers<[1], [0], [0], [1], [0, 0, 1, 1], [], []>} : vector<4x24xf32>, vector<24x256xf32>, vector<4x256xf32> -> vector<4x256xf32>
    %13 = arith.addf %8, %12 : vector<4x256xf32>
    %14 = vector.extract_strided_slice %2 {offsets = [0, 32], sizes = [24, 256], strides = [1, 1]} : vector<24x288xf32> to vector<24x256xf32>
    %c2 = arith.constant 2 : index
    %c0_10 = arith.constant 0 : index
    %c0_11 = arith.constant 0 : index
    %15 = vector.load %arg2[%c2, %c0_10, %c0_11] : memref<3x4x24xf32, #tpu.memory_space<vmem>>, vector<1x4x24xf32>
    %16 = vector.shape_cast %15 : vector<1x4x24xf32> to vector<4x24xf32>
    %cst_12 = arith.constant dense<0.000000e+00> : vector<4x256xf32>
    %17 = tpu.matmul %16, %14, %cst_12 {dimension_numbers = #tpu.dot_dimension_numbers<[1], [0], [0], [1], [0, 0, 1, 1], [], []>} : vector<4x24xf32>, vector<24x256xf32>, vector<4x256xf32> -> vector<4x256xf32>
    %18 = arith.addf %13, %17 : vector<4x256xf32>
    %c1_13 = arith.constant 1 : index
    %c0_14 = arith.constant 0 : index
    %c0_15 = arith.constant 0 : index
    %19 = vector.load %arg0[%c1_13, %c0_14, %c0_15] : memref<2x24x288xf32, #tpu.memory_space<vmem>>, vector<1x24x288xf32>
    %20 = vector.shape_cast %19 : vector<1x24x288xf32> to vector<24x288xf32>
    %cst_16 = arith.constant 0.000000e+00 : f32
    %21 = vector.broadcast %cst_16 : f32 to vector<4x256xf32>
    %22 = vector.extract_strided_slice %20 {offsets = [0, 0], sizes = [24, 256], strides = [1, 1]} : vector<24x288xf32> to vector<24x256xf32>
    %c0_17 = arith.constant 0 : index
    %c0_18 = arith.constant 0 : index
    %c0_19 = arith.constant 0 : index
    %23 = vector.load %arg2[%c0_17, %c0_18, %c0_19] : memref<3x4x24xf32, #tpu.memory_space<vmem>>, vector<1x4x24xf32>
    %24 = vector.shape_cast %23 : vector<1x4x24xf32> to vector<4x24xf32>
    %cst_20 = arith.constant dense<0.000000e+00> : vector<4x256xf32>
    %25 = tpu.matmul %24, %22, %cst_20 {dimension_numbers = #tpu.dot_dimension_numbers<[1], [0], [0], [1], [0, 0, 1, 1], [], []>} : vector<4x24xf32>, vector<24x256xf32>, vector<4x256xf32> -> vector<4x256xf32>
    %26 = arith.addf %21, %25 : vector<4x256xf32>
    %27 = vector.extract_strided_slice %20 {offsets = [0, 16], sizes = [24, 256], strides = [1, 1]} : vector<24x288xf32> to vector<24x256xf32>
    %c1_21 = arith.constant 1 : index
    %c0_22 = arith.constant 0 : index
    %c0_23 = arith.constant 0 : index
    %28 = vector.load %arg2[%c1_21, %c0_22, %c0_23] : memref<3x4x24xf32, #tpu.memory_space<vmem>>, vector<1x4x24xf32>
    %29 = vector.shape_cast %28 : vector<1x4x24xf32> to vector<4x24xf32>
    %cst_24 = arith.constant dense<0.000000e+00> : vector<4x256xf32>
    %30 = tpu.matmul %29, %27, %cst_24 {dimension_numbers = #tpu.dot_dimension_numbers<[1], [0], [0], [1], [0, 0, 1, 1], [], []>} : vector<4x24xf32>, vector<24x256xf32>, vector<4x256xf32> -> vector<4x256xf32>
    %31 = arith.addf %26, %30 : vector<4x256xf32>
    %32 = vector.extract_strided_slice %20 {offsets = [0, 32], sizes = [24, 256], strides = [1, 1]} : vector<24x288xf32> to vector<24x256xf32>
    %c2_25 = arith.constant 2 : index
    %c0_26 = arith.constant 0 : index
    %c0_27 = arith.constant 0 : index
    %33 = vector.load %arg2[%c2_25, %c0_26, %c0_27] : memref<3x4x24xf32, #tpu.memory_space<vmem>>, vector<1x4x24xf32>
    %34 = vector.shape_cast %33 : vector<1x4x24xf32> to vector<4x24xf32>
    %cst_28 = arith.constant dense<0.000000e+00> : vector<4x256xf32>
    %35 = tpu.matmul %34, %32, %cst_28 {dimension_numbers = #tpu.dot_dimension_numbers<[1], [0], [0], [1], [0, 0, 1, 1], [], []>} : vector<4x24xf32>, vector<24x256xf32>, vector<4x256xf32> -> vector<4x256xf32>
    %36 = arith.addf %31, %35 : vector<4x256xf32>
    %cst_29 = arith.constant dense<0.000000e+00> : vector<4xf32>
    %37 = vector.multi_reduction <add>, %18, %cst_29 [1] : vector<4x256xf32> to vector<4xf32>
    %38 = vector.shape_cast %37 : vector<4xf32> to vector<4x1xf32>
    %cst_30 = arith.constant 0.000000e+00 : f32
    %39 = vector.broadcast %cst_30 : f32 to vector<4x1xf32>
    %40 = arith.addf %39, %38 : vector<4x1xf32>
    %cst_31 = arith.constant dense<0.000000e+00> : vector<4xf32>
    %41 = vector.multi_reduction <add>, %36, %cst_31 [1] : vector<4x256xf32> to vector<4xf32>
    %42 = vector.shape_cast %41 : vector<4xf32> to vector<4x1xf32>
    %43 = arith.addf %40, %42 : vector<4x1xf32>
    %cst_32 = arith.constant 0.001953125 : f32
    %44 = vector.broadcast %cst_32 : f32 to vector<4x1xf32>
    %45 = arith.mulf %43, %44 : vector<4x1xf32>
    %46 = vector.broadcast %45 : vector<4x1xf32> to vector<4x256xf32>
    %47 = arith.subf %18, %46 : vector<4x256xf32>
    %48 = arith.mulf %47, %47 : vector<4x256xf32>
    %cst_33 = arith.constant dense<0.000000e+00> : vector<4xf32>
    %49 = vector.multi_reduction <add>, %48, %cst_33 [1] : vector<4x256xf32> to vector<4xf32>
    %50 = vector.shape_cast %49 : vector<4xf32> to vector<4x1xf32>
    %cst_34 = arith.constant 0.000000e+00 : f32
    %51 = vector.broadcast %cst_34 : f32 to vector<4x1xf32>
    %52 = arith.addf %51, %50 : vector<4x1xf32>
    %53 = vector.broadcast %45 : vector<4x1xf32> to vector<4x256xf32>
    %54 = arith.subf %36, %53 : vector<4x256xf32>
    %55 = arith.mulf %54, %54 : vector<4x256xf32>
    %cst_35 = arith.constant dense<0.000000e+00> : vector<4xf32>
    %56 = vector.multi_reduction <add>, %55, %cst_35 [1] : vector<4x256xf32> to vector<4xf32>
    %57 = vector.shape_cast %56 : vector<4xf32> to vector<4x1xf32>
    %58 = arith.addf %52, %57 : vector<4x1xf32>
    %cst_36 = arith.constant 0.001953125 : f32
    %59 = vector.broadcast %cst_36 : f32 to vector<4x1xf32>
    %60 = arith.mulf %58, %59 : vector<4x1xf32>
    %cst_37 = arith.constant 9.99999974E-6 : f32
    %61 = vector.broadcast %cst_37 : f32 to vector<4x1xf32>
    %62 = arith.addf %60, %61 : vector<4x1xf32>
    %63 = math.rsqrt %62 : vector<4x1xf32>
    %c0_38 = arith.constant 0 : index
    %c0_39 = arith.constant 0 : index
    %64 = vector.load %arg3[%c0_38, %c0_39] : memref<4x1xf32, #tpu.memory_space<vmem>>, vector<4x1xf32>
    %65 = arith.mulf %63, %64 : vector<4x1xf32>
    %c0_40 = arith.constant 0 : index
    %c0_41 = arith.constant 0 : index
    %66 = vector.load %arg4[%c0_40, %c0_41] : memref<4x1xf32, #tpu.memory_space<vmem>>, vector<4x1xf32>
    %67 = vector.broadcast %45 : vector<4x1xf32> to vector<4x256xf32>
    %68 = arith.subf %18, %67 : vector<4x256xf32>
    %69 = vector.broadcast %65 : vector<4x1xf32> to vector<4x256xf32>
    %70 = arith.mulf %68, %69 : vector<4x256xf32>
    %71 = vector.broadcast %66 : vector<4x1xf32> to vector<4x256xf32>
    %72 = arith.addf %70, %71 : vector<4x256xf32>
    %c0_42 = arith.constant 0 : index
    %c0_43 = arith.constant 0 : index
    %c0_44 = arith.constant 0 : index
    %73 = vector.load %arg1[%c0_42, %c0_43, %c0_44] : memref<2x4x256xf32, #tpu.memory_space<vmem>>, vector<1x4x256xf32>
    %74 = vector.shape_cast %73 : vector<1x4x256xf32> to vector<4x256xf32>
    %75 = arith.addf %72, %74 : vector<4x256xf32>
    %cst_45 = arith.constant 0.000000e+00 : f32
    %76 = vector.broadcast %cst_45 : f32 to vector<4x256xf32>
    %77 = arith.cmpf oge, %75, %76 : vector<4x256xf32>
    %78 = vector.broadcast %0 : f32 to vector<4x256xf32>
    %79 = arith.mulf %78, %75 : vector<4x256xf32>
    %80 = arith.select %77, %75, %79 : vector<4x256xi1>, vector<4x256xf32>
    %c0_46 = arith.constant 0 : index
    %c0_47 = arith.constant 0 : index
    %c0_48 = arith.constant 0 : index
    %81 = vector.load %arg6[%c0_46, %c0_47, %c0_48] : memref<2x4x256xf32, #tpu.memory_space<vmem>>, vector<1x4x256xf32>
    %82 = vector.shape_cast %81 : vector<1x4x256xf32> to vector<4x256xf32>
    %83 = vector.shape_cast %80 : vector<4x256xf32> to vector<1x4x256xf32>
    tpu.vector_store %arg6[%c0_46, %c0_47, %c0_48], %83 {strides = array<i32>} : memref<2x4x256xf32, #tpu.memory_space<vmem>>, vector<1x4x256xf32>,
    %84 = vector.broadcast %45 : vector<4x1xf32> to vector<4x256xf32>
    %85 = arith.subf %36, %84 : vector<4x256xf32>
    %86 = vector.broadcast %65 : vector<4x1xf32> to vector<4x256xf32>
    %87 = arith.mulf %85, %86 : vector<4x256xf32>
    %88 = vector.broadcast %66 : vector<4x1xf32> to vector<4x256xf32>
    %89 = arith.addf %87, %88 : vector<4x256xf32>
    %c1_49 = arith.constant 1 : index
    %c0_50 = arith.constant 0 : index
    %c0_51 = arith.constant 0 : index
    %90 = vector.load %arg1[%c1_49, %c0_50, %c0_51] : memref<2x4x256xf32, #tpu.memory_space<vmem>>, vector<1x4x256xf32>
    %91 = vector.shape_cast %90 : vector<1x4x256xf32> to vector<4x256xf32>
    %92 = arith.addf %89, %91 : vector<4x256xf32>
    %cst_52 = arith.constant 0.000000e+00 : f32
    %93 = vector.broadcast %cst_52 : f32 to vector<4x256xf32>
    %94 = arith.cmpf oge, %92, %93 : vector<4x256xf32>
    %95 = vector.broadcast %0 : f32 to vector<4x256xf32>
    %96 = arith.mulf %95, %92 : vector<4x256xf32>
    %97 = arith.select %94, %92, %96 : vector<4x256xi1>, vector<4x256xf32>
    %c1_53 = arith.constant 1 : index
    %c0_54 = arith.constant 0 : index
    %c0_55 = arith.constant 0 : index
    %98 = vector.load %arg6[%c1_53, %c0_54, %c0_55] : memref<2x4x256xf32, #tpu.memory_space<vmem>>, vector<1x4x256xf32>
    %99 = vector.shape_cast %98 : vector<1x4x256xf32> to vector<4x256xf32>
    %100 = vector.shape_cast %97 : vector<4x256xf32> to vector<1x4x256xf32>
    tpu.vector_store %arg6[%c1_53, %c0_54, %c0_55], %100 {strides = array<i32>} : memref<2x4x256xf32, #tpu.memory_space<vmem>>, vector<1x4x256xf32>,
    return
  }
}

</mosaic_0001>

<llo_original>
// kernel: inception_block_forward.2
$region0: #{inception_block_forward.2}
  #allocation0 [shape = 'u32[]', space=smem, size = 0x4, offset = 0x4, fixed_abs, tag = 'smem constant byte address 0x4 - core index']
  #allocation1 [shape = 'u32[72,128]{1,0:T(1,128)}', space=vmem, size = 0x9000, scoped, tag = 'internal scratch']
  #allocation2 [shape = 'f32[1]{0:T(128)S(6)}', space=smem, size = 0x200, scoped, tag = 'scoped memory for inception_block_forward.2']
  %s0 = inlined_call_operand.vmem [shape: f32[2,12,288], index: 0, kind: input, shape index: {}]
  %s1 = inlined_call_operand.vmem [shape: f32[2,12,352], index: 1, kind: input, shape index: {}]
  %s2 = inlined_call_operand.vmem [shape: f32[6,4,12], index: 2, kind: input, shape index: {}]
  %s3 = inlined_call_operand.vmem [shape: f32[2,4,1], index: 3, kind: input, shape index: {}]
  %s4 = inlined_call_operand.vmem [shape: f32[2,4,1], index: 4, kind: input, shape index: {}]
  %s5 = inlined_call_operand.<no memory space> [shape: f32[1], index: 5, kind: input, shape index: {}]
  %s6 = inlined_call_operand.vmem [shape: f32[2,2,4,256], index: 6, kind: output, shape index: {}]
  %s7 = sld [smem:[#allocation0]]
  $region34: #{inception_block_forward.2} parent=0
    _
  %s9 = ssub.s32 1, %s7
  %s10 = scalar_select 0, %s9, %s7
  %11 = sst [smem:[#allocation2]] %s5
  // Predicated region
  $region2: #{inception_block_forward.2} parent=0 // pred_check
    _
  $region3: #{inception_block_forward.2} parent=0 // pred_check_branch
    %13 = sbr.rel (0) target = $region5
  $region4: #{inception_block_forward.2} parent=0 // pred_region
    _
  $region5: #{inception_block_forward.2} parent=0 // pred_fallthru
    _
  // Predicated region
  $region6: #{inception_block_forward.2} parent=0 // pred_check
    _
  $region7: #{inception_block_forward.2} parent=0 // pred_check_branch
    %15 = sbr.rel (0) target = $region9
  $region8: #{inception_block_forward.2} parent=0 // pred_region
    _
  $region9: #{inception_block_forward.2} parent=0 // pred_fallthru
    _
  // Predicated region
  $region10: #{inception_block_forward.2} parent=0 // pred_check
    _
  $region11: #{inception_block_forward.2} parent=0 // pred_check_branch
    %17 = sbr.rel (0) target = $region13
  $region12: #{inception_block_forward.2} parent=0 // pred_region
    _
  $region13: #{inception_block_forward.2} parent=0 // pred_fallthru
    _
  // Predicated region
  $region14: #{inception_block_forward.2} parent=0 // pred_check
    _
  $region15: #{inception_block_forward.2} parent=0 // pred_check_branch
    %19 = sbr.rel (0) target = $region17
  $region16: #{inception_block_forward.2} parent=0 // pred_region
    _
  $region17: #{inception_block_forward.2} parent=0 // pred_fallthru
    _
  // Predicated region
  $region18: #{inception_block_forward.2} parent=0 // pred_check
    _
  $region19: #{inception_block_forward.2} parent=0 // pred_check_branch
    %21 = sbr.rel (0) target = $region21
  $region20: #{inception_block_forward.2} parent=0 // pred_region
    _
  $region21: #{inception_block_forward.2} parent=0 // pred_fallthru
    _
  // Predicated region
  $region22: #{inception_block_forward.2} parent=0 // pred_check
    _
  $region23: #{inception_block_forward.2} parent=0 // pred_check_branch
    %23 = sbr.rel (0) target = $region25
  $region24: #{inception_block_forward.2} parent=0 // pred_region
    _
  $region25: #{inception_block_forward.2} parent=0 // pred_fallthru
    _
  %s24 = sld [smem:[#allocation2]]
  %v25 = vld [vmem:[%s0] sm:$0xff]
  %v26 = vld [vmem:[%s0 + $0x8] sm:$0xff]
  %v27 = vld [vmem:[%s0 + $0x10] sm:$0xff]
  %v28 = vld [vmem:[%s0 + $0x18] sm:$0xf]
  %v29 = vld [vmem:[%s0 + $0x20] sm:$0xf]
  %v30 = vld [vmem:[%s0 + $0x28] sm:$0xf]
  %v31 = vld [vmem:[%s2] sm:$0xf]
  %s32 = scalar_lea.vmem %s2, 4
  %v33 = vld [vmem:[%s32] sm:$0xf]
  %40 = vrot.lane.b32.xlu0 %v25, 112
  %v41 = vpop.permute.xlu0 %40
  %42 = vrot.lane.b32.xlu0 %v26, 112
  %v43 = vpop.permute.xlu0 %42
  %44 = vrot.lane.b32.xlu0 %v27, 112
  %v45 = vpop.permute.xlu0 %44
  %46 = vrot.lane.b32.xlu0 %v28, 112
  %v47 = vpop.permute.xlu0 %46
  %48 = vrot.lane.b32.xlu0 %v29, 112
  %v49 = vpop.permute.xlu0 %48
  %50 = vrot.lane.b32.xlu0 %v30, 112
  %v51 = vpop.permute.xlu0 %50
  %vm52 = vcmask 916480
  %v53 = vsel %vm52, %v41, %v43
  %v54 = vsel %vm52, %v43, %v45
  %v55 = vsel %vm52, %v47, %v49
  %v56 = vsel %vm52, %v49, %v51
  %vm59 = vcmask 97280
  %v61 = vsel %vm59, %v33, 0
  %vm63 = vcmask 1043456
  %v64 = vsel %vm63, %v55, 0
  %v66 = vsel %vm63, %v56, 0
  %68 = vmatpush.msra.mxu0 0.0
  %69 = vmatpush.msra.mxu0 0.0
  %70 = vmatpush.msra.mxu0 0.0
  %71 = vmatpush.msra.mxu0 0.0
  %72 = vmatpush.msra.mxu0 0.0
  %73 = vmatpush.msra.mxu0 0.0
  %74 = vmatpush.msra.mxu0 0.0
  %75 = vmatpush.msra.mxu0 0.0
  %76 = vmatpush.msra.mxu0 0.0
  %77 = vmatpush.msra.mxu0 0.0
  %78 = vmatpush.msra.mxu0 0.0
  %79 = vmatpush.msra.mxu0 0.0
  %80 = vmatpush.msra.mxu0 0.0
  %81 = vmatpush.msra.mxu0 0.0
  %82 = vmatpush.msra.mxu0 %v64
  %83 = vmatpush.msra.mxu0 %v53
  %84 = vmatmul.f32.gmra.mxu0 %v61
  %v85 = vpop.f32.mrf.mxu0
  %v86 = vadd.f32 0.0, %v85
  %87 = vdwg.mxu0
  %88 = vmatpush.msra.mxu0 0.0
  %89 = vmatpush.msra.mxu0 0.0
  %90 = vmatpush.msra.mxu0 0.0
  %91 = vmatpush.msra.mxu0 0.0
  %92 = vmatpush.msra.mxu0 0.0
  %93 = vmatpush.msra.mxu0 0.0
  %94 = vmatpush.msra.mxu0 0.0
  %95 = vmatpush.msra.mxu0 0.0
  %96 = vmatpush.msra.mxu0 0.0
  %97 = vmatpush.msra.mxu0 0.0
  %98 = vmatpush.msra.mxu0 0.0
  %99 = vmatpush.msra.mxu0 0.0
  %100 = vmatpush.msra.mxu0 0.0
  %101 = vmatpush.msra.mxu0 0.0
  %102 = vmatpush.msra.mxu0 %v66
  %103 = vmatpush.msra.mxu0 %v54
  %104 = vmatmul.f32.gmra.mxu0 %v61
  %v105 = vpop.f32.mrf.mxu0
  %v106 = vadd.f32 0.0, %v105
  %107 = vdwg.mxu0
  %v109 = vsel %vm59, %v31, 0
  %v111 = vsel %vm63, %v28, 0
  %v113 = vsel %vm63, %v29, 0
  %115 = vmatpush.msra.mxu0 0.0
  %116 = vmatpush.msra.mxu0 0.0
  %117 = vmatpush.msra.mxu0 0.0
  %118 = vmatpush.msra.mxu0 0.0
  %119 = vmatpush.msra.mxu0 0.0
  %120 = vmatpush.msra.mxu0 0.0
  %121 = vmatpush.msra.mxu0 0.0
  %122 = vmatpush.msra.mxu0 0.0
  %123 = vmatpush.msra.mxu0 0.0
  %124 = vmatpush.msra.mxu0 0.0
  %125 = vmatpush.msra.mxu0 0.0
  %126 = vmatpush.msra.mxu0 0.0
  %127 = vmatpush.msra.mxu0 0.0
  %128 = vmatpush.msra.mxu0 0.0
  %129 = vmatpush.msra.mxu0 %v111
  %130 = vmatpush.msra.mxu0 %v25
  %131 = vmatmul.f32.gmra.mxu0 %v109
  %v132 = vpop.f32.mrf.mxu0
  %v133 = vadd.f32 %v86, %v132
  %134 = vdwg.mxu0
  %135 = vmatpush.msra.mxu0 0.0
  %136 = vmatpush.msra.mxu0 0.0
  %137 = vmatpush.msra.mxu0 0.0
  %138 = vmatpush.msra.mxu0 0.0
  %139 = vmatpush.msra.mxu0 0.0
  %140 = vmatpush.msra.mxu0 0.0
  %141 = vmatpush.msra.mxu0 0.0
  %142 = vmatpush.msra.mxu0 0.0
  %143 = vmatpush.msra.mxu0 0.0
  %144 = vmatpush.msra.mxu0 0.0
  %145 = vmatpush.msra.mxu0 0.0
  %146 = vmatpush.msra.mxu0 0.0
  %147 = vmatpush.msra.mxu0 0.0
  %148 = vmatpush.msra.mxu0 0.0
  %149 = vmatpush.msra.mxu0 %v113
  %150 = vmatpush.msra.mxu0 %v26
  %151 = vmatmul.f32.gmra.mxu0 %v109
  %v152 = vpop.f32.mrf.mxu0
  %v153 = vadd.f32 %v106, %v152
  %154 = vdwg.mxu0
  %s155 = scalar_lea.vmem %s2, 8
  %v156 = vld [vmem:[%s155] sm:$0xf]
  %157 = vrot.lane.b32.xlu0 %v25, 96
  %v158 = vpop.permute.xlu0 %157
  %159 = vrot.lane.b32.xlu0 %v26, 96
  %v160 = vpop.permute.xlu0 %159
  %161 = vrot.lane.b32.xlu0 %v27, 96
  %v162 = vpop.permute.xlu0 %161
  %163 = vrot.lane.b32.xlu0 %v28, 96
  %v164 = vpop.permute.xlu0 %163
  %165 = vrot.lane.b32.xlu0 %v29, 96
  %v166 = vpop.permute.xlu0 %165
  %167 = vrot.lane.b32.xlu0 %v30, 96
  %v168 = vpop.permute.xlu0 %167
  %vm169 = vcmask 785408
  %v170 = vsel %vm169, %v158, %v160
  %v171 = vsel %vm169, %v160, %v162
  %v172 = vsel %vm169, %v164, %v166
  %v173 = vsel %vm169, %v166, %v168
  %v177 = vsel %vm59, %v156, 0
  %v179 = vsel %vm63, %v172, 0
  %v181 = vsel %vm63, %v173, 0
  %183 = vmatpush.msra.mxu0 0.0
  %184 = vmatpush.msra.mxu0 0.0
  %185 = vmatpush.msra.mxu0 0.0
  %186 = vmatpush.msra.mxu0 0.0
  %187 = vmatpush.msra.mxu0 0.0
  %188 = vmatpush.msra.mxu0 0.0
  %189 = vmatpush.msra.mxu0 0.0
  %190 = vmatpush.msra.mxu0 0.0
  %191 = vmatpush.msra.mxu0 0.0
  %192 = vmatpush.msra.mxu0 0.0
  %193 = vmatpush.msra.mxu0 0.0
  %194 = vmatpush.msra.mxu0 0.0
  %195 = vmatpush.msra.mxu0 0.0
  %196 = vmatpush.msra.mxu0 0.0
  %197 = vmatpush.msra.mxu0 %v179
  %198 = vmatpush.msra.mxu0 %v170
  %199 = vmatmul.f32.gmra.mxu0 %v177
  %v200 = vpop.f32.mrf.mxu0
  %v201 = vadd.f32 0.0, %v200
  %202 = vdwg.mxu0
  %203 = vmatpush.msra.mxu0 0.0
  %204 = vmatpush.msra.mxu0 0.0
  %205 = vmatpush.msra.mxu0 0.0
  %206 = vmatpush.msra.mxu0 0.0
  %207 = vmatpush.msra.mxu0 0.0
  %208 = vmatpush.msra.mxu0 0.0
  %209 = vmatpush.msra.mxu0 0.0
  %210 = vmatpush.msra.mxu0 0.0
  %211 = vmatpush.msra.mxu0 0.0
  %212 = vmatpush.msra.mxu0 0.0
  %213 = vmatpush.msra.mxu0 0.0
  %214 = vmatpush.msra.mxu0 0.0
  %215 = vmatpush.msra.mxu0 0.0
  %216 = vmatpush.msra.mxu0 0.0
  %217 = vmatpush.msra.mxu0 %v181
  %218 = vmatpush.msra.mxu0 %v171
  %219 = vmatmul.f32.gmra.mxu0 %v177
  %v220 = vpop.f32.mrf.mxu0
  %v221 = vadd.f32 0.0, %v220
  %222 = vdwg.mxu0
  %v223 = vadd.f32 %v133, %v201
  %v224 = vadd.f32 %v153, %v221
  %s225 = scalar_lea.vmem %s0, 48
  %v226 = vld [vmem:[%s225] sm:$0xff]
  %v227 = vld [vmem:[%s225 + $0x8] sm:$0xff]
  %v228 = vld [vmem:[%s225 + $0x10] sm:$0xff]
  %v229 = vld [vmem:[%s225 + $0x18] sm:$0xf]
  %v230 = vld [vmem:[%s225 + $0x20] sm:$0xf]
  %v231 = vld [vmem:[%s225 + $0x28] sm:$0xf]
  %238 = vrot.lane.b32.xlu0 %v226, 112
  %v239 = vpop.permute.xlu0 %238
  %240 = vrot.lane.b32.xlu0 %v227, 112
  %v241 = vpop.permute.xlu0 %240
  %242 = vrot.lane.b32.xlu0 %v228, 112
  %v243 = vpop.permute.xlu0 %242
  %244 = vrot.lane.b32.xlu0 %v229, 112
  %v245 = vpop.permute.xlu0 %244
  %246 = vrot.lane.b32.xlu0 %v230, 112
  %v247 = vpop.permute.xlu0 %246
  %248 = vrot.lane.b32.xlu0 %v231, 112
  %v249 = vpop.permute.xlu0 %248
  %v250 = vsel %vm52, %v239, %v241
  %v251 = vsel %vm52, %v241, %v243
  %v252 = vsel %vm52, %v245, %v247
  %v253 = vsel %vm52, %v247, %v249
  %v256 = vsel %vm63, %v252, 0
  %v258 = vsel %vm63, %v253, 0
  %260 = vmatpush.msra.mxu0 0.0
  %261 = vmatpush.msra.mxu0 0.0
  %262 = vmatpush.msra.mxu0 0.0
  %263 = vmatpush.msra.mxu0 0.0
  %264 = vmatpush.msra.mxu0 0.0
  %265 = vmatpush.msra.mxu0 0.0
  %266 = vmatpush.msra.mxu0 0.0
  %267 = vmatpush.msra.mxu0 0.0
  %268 = vmatpush.msra.mxu0 0.0
  %269 = vmatpush.msra.mxu0 0.0
  %270 = vmatpush.msra.mxu0 0.0
  %271 = vmatpush.msra.mxu0 0.0
  %272 = vmatpush.msra.mxu0 0.0
  %273 = vmatpush.msra.mxu0 0.0
  %274 = vmatpush.msra.mxu0 %v256
  %275 = vmatpush.msra.mxu0 %v250
  %276 = vmatmul.f32.gmra.mxu0 %v61
  %v277 = vpop.f32.mrf.mxu0
  %v278 = vadd.f32 0.0, %v277
  %279 = vdwg.mxu0
  %280 = vmatpush.msra.mxu0 0.0
  %281 = vmatpush.msra.mxu0 0.0
  %282 = vmatpush.msra.mxu0 0.0
  %283 = vmatpush.msra.mxu0 0.0
  %284 = vmatpush.msra.mxu0 0.0
  %285 = vmatpush.msra.mxu0 0.0
  %286 = vmatpush.msra.mxu0 0.0
  %287 = vmatpush.msra.mxu0 0.0
  %288 = vmatpush.msra.mxu0 0.0
  %289 = vmatpush.msra.mxu0 0.0
  %290 = vmatpush.msra.mxu0 0.0
  %291 = vmatpush.msra.mxu0 0.0
  %292 = vmatpush.msra.mxu0 0.0
  %293 = vmatpush.msra.mxu0 0.0
  %294 = vmatpush.msra.mxu0 %v258
  %295 = vmatpush.msra.mxu0 %v251
  %296 = vmatmul.f32.gmra.mxu0 %v61
  %v297 = vpop.f32.mrf.mxu0
  %v298 = vadd.f32 0.0, %v297
  %299 = vdwg.mxu0
  %v300 = vsel %vm63, %v229, 0
  %v302 = vsel %vm63, %v230, 0
  %304 = vmatpush.msra.mxu0 0.0
  %305 = vmatpush.msra.mxu0 0.0
  %306 = vmatpush.msra.mxu0 0.0
  %307 = vmatpush.msra.mxu0 0.0
  %308 = vmatpush.msra.mxu0 0.0
  %309 = vmatpush.msra.mxu0 0.0
  %310 = vmatpush.msra.mxu0 0.0
  %311 = vmatpush.msra.mxu0 0.0
  %312 = vmatpush.msra.mxu0 0.0
  %313 = vmatpush.msra.mxu0 0.0
  %314 = vmatpush.msra.mxu0 0.0
  %315 = vmatpush.msra.mxu0 0.0
  %316 = vmatpush.msra.mxu0 0.0
  %317 = vmatpush.msra.mxu0 0.0
  %318 = vmatpush.msra.mxu0 %v300
  %319 = vmatpush.msra.mxu0 %v226
  %320 = vmatmul.f32.gmra.mxu0 %v109
  %v321 = vpop.f32.mrf.mxu0
  %v322 = vadd.f32 %v278, %v321
  %323 = vdwg.mxu0
  %324 = vmatpush.msra.mxu0 0.0
  %325 = vmatpush.msra.mxu0 0.0
  %326 = vmatpush.msra.mxu0 0.0
  %327 = vmatpush.msra.mxu0 0.0
  %328 = vmatpush.msra.mxu0 0.0
  %329 = vmatpush.msra.mxu0 0.0
  %330 = vmatpush.msra.mxu0 0.0
  %331 = vmatpush.msra.mxu0 0.0
  %332 = vmatpush.msra.mxu0 0.0
  %333 = vmatpush.msra.mxu0 0.0
  %334 = vmatpush.msra.mxu0 0.0
  %335 = vmatpush.msra.mxu0 0.0
  %336 = vmatpush.msra.mxu0 0.0
  %337 = vmatpush.msra.mxu0 0.0
  %338 = vmatpush.msra.mxu0 %v302
  %339 = vmatpush.msra.mxu0 %v227
  %340 = vmatmul.f32.gmra.mxu0 %v109
  %v341 = vpop.f32.mrf.mxu0
  %v342 = vadd.f32 %v298, %v341
  %343 = vdwg.mxu0
  %344 = vrot.lane.b32.xlu0 %v226, 96
  %v345 = vpop.permute.xlu0 %344
  %346 = vrot.lane.b32.xlu0 %v227, 96
  %v347 = vpop.permute.xlu0 %346
  %348 = vrot.lane.b32.xlu0 %v228, 96
  %v349 = vpop.permute.xlu0 %348
  %350 = vrot.lane.b32.xlu0 %v229, 96
  %v351 = vpop.permute.xlu0 %350
  %352 = vrot.lane.b32.xlu0 %v230, 96
  %v353 = vpop.permute.xlu0 %352
  %354 = vrot.lane.b32.xlu0 %v231, 96
  %v355 = vpop.permute.xlu0 %354
  %v356 = vsel %vm169, %v345, %v347
  %v357 = vsel %vm169, %v347, %v349
  %v358 = vsel %vm169, %v351, %v353
  %v359 = vsel %vm169, %v353, %v355
  %v362 = vsel %vm63, %v358, 0
  %v364 = vsel %vm63, %v359, 0
  %366 = vmatpush.msra.mxu0 0.0
  %367 = vmatpush.msra.mxu0 0.0
  %368 = vmatpush.msra.mxu0 0.0
  %369 = vmatpush.msra.mxu0 0.0
  %370 = vmatpush.msra.mxu0 0.0
  %371 = vmatpush.msra.mxu0 0.0
  %372 = vmatpush.msra.mxu0 0.0
  %373 = vmatpush.msra.mxu0 0.0
  %374 = vmatpush.msra.mxu0 0.0
  %375 = vmatpush.msra.mxu0 0.0
  %376 = vmatpush.msra.mxu0 0.0
  %377 = vmatpush.msra.mxu0 0.0
  %378 = vmatpush.msra.mxu0 0.0
  %379 = vmatpush.msra.mxu0 0.0
  %380 = vmatpush.msra.mxu0 %v362
  %381 = vmatpush.msra.mxu0 %v356
  %382 = vmatmul.f32.gmra.mxu0 %v177
  %v383 = vpop.f32.mrf.mxu0
  %v384 = vadd.f32 0.0, %v383
  %385 = vdwg.mxu0
  %386 = vmatpush.msra.mxu0 0.0
  %387 = vmatpush.msra.mxu0 0.0
  %388 = vmatpush.msra.mxu0 0.0
  %389 = vmatpush.msra.mxu0 0.0
  %390 = vmatpush.msra.mxu0 0.0
  %391 = vmatpush.msra.mxu0 0.0
  %392 = vmatpush.msra.mxu0 0.0
  %393 = vmatpush.msra.mxu0 0.0
  %394 = vmatpush.msra.mxu0 0.0
  %395 = vmatpush.msra.mxu0 0.0
  %396 = vmatpush.msra.mxu0 0.0
  %397 = vmatpush.msra.mxu0 0.0
  %398 = vmatpush.msra.mxu0 0.0
  %399 = vmatpush.msra.mxu0 0.0
  %400 = vmatpush.msra.mxu0 %v364
  %401 = vmatpush.msra.mxu0 %v357
  %402 = vmatmul.f32.gmra.mxu0 %v177
  %v403 = vpop.f32.mrf.mxu0
  %v404 = vadd.f32 0.0, %v403
  %405 = vdwg.mxu0
  %v406 = vadd.f32 %v322, %v384
  %v407 = vadd.f32 %v342, %v404
  %v408 = vsel %vm63, %v223, 0.0
  %v409 = vsel %vm63, %v224, 0.0
  %v410 = vadd.f32 %v408, %v409
  %411 = vadd.xlane.f32.xlu0 %v410
  %v412 = vpop.xlane.xlu0 %411
  %v413 = vadd.f32 %v412, 0.0
  %v414 = vsel %vm63, %v406, 0.0
  %v415 = vsel %vm63, %v407, 0.0
  %v416 = vadd.f32 %v414, %v415
  %417 = vadd.xlane.f32.xlu0 %v416
  %v418 = vpop.xlane.xlu0 %417
  %v419 = vadd.f32 %v413, %v418
  %v420 = vmul.f32 %v419, 0.001953125
  %v421 = vsub.f32 %v223, %v420
  %v422 = vsub.f32 %v224, %v420
  %v423 = vmul.f32 %v421, %v421
  %v424 = vmul.f32 %v422, %v422
  %v425 = vsel %vm63, %v423, 0.0
  %v426 = vsel %vm63, %v424, 0.0
  %v427 = vadd.f32 %v425, %v426
  %428 = vadd.xlane.f32.xlu0 %v427
  %v429 = vpop.xlane.xlu0 %428
  %v430 = vadd.f32 %v429, 0.0
  %v431 = vsub.f32 %v406, %v420
  %v432 = vsub.f32 %v407, %v420
  %v433 = vmul.f32 %v431, %v431
  %v434 = vmul.f32 %v432, %v432
  %v435 = vsel %vm63, %v433, 0.0
  %v436 = vsel %vm63, %v434, 0.0
  %v437 = vadd.f32 %v435, %v436
  %438 = vadd.xlane.f32.xlu0 %v437
  %v439 = vpop.xlane.xlu0 %438
  %v440 = vadd.f32 %v430, %v439
  %v441 = vmul.f32 %v440, 0.001953125
  %v442 = vadd.f32 %v441, 1e-05
  %v443 = vrsqrt.pop %v442
  %v444 = vmul.f32 %v443, %v442
  %v445 = vmul.f32 %v444, %v443
  %v446 = vmul.f32 0.5, %v445
  %v447 = vsub.f32 1.5, %v446
  %v448 = vmul.f32 %v443, %v447
  %vm449 = vweird.f32 %v442
  %vm450 = vweird.f32 %v443
  %vm451 = vmor %vm449, %vm450
  %v452 = vsel %vm451, %v443, %v448
  %v453 = vld [vmem:[%s3] sm:$0xf]
  %v454 = vmul.f32 %v452, %v453
  %v455 = vld [vmem:[%s4] sm:$0xf]
  %457 = vset.pattern.permute.xlu0 0
  %458 = vperm.xlu0 %457, %v454
  %v459 = vpop.permute.xlu0 %458
  %v461 = vmul.f32 %v421, %v459
  %v462 = vmul.f32 %v422, %v459
  %464 = vset.pattern.permute.xlu0 0
  %465 = vperm.xlu0 %464, %v455
  %v466 = vpop.permute.xlu0 %465
  %v468 = vadd.f32 %v461, %v466
  %v469 = vadd.f32 %v462, %v466
  %vm470 = vcmp.ge.f32.partialorder %v468, 0.0
  %vm471 = vcmp.ge.f32.partialorder %v469, 0.0
  %v472 = vstv %s24
  %v473 = vmul.f32 %v472, %v468
  %v474 = vmul.f32 %v472, %v469
  %v475 = vsel %vm470, %v468, %v473
  %v476 = vsel %vm471, %v469, %v474
  %v479 = vrot.slane %v476, 4
  %v480 = vsel %vm63, %v475, %v479
  %482 = vst [vmem:[%s6] sm:$0xff] %v480
  %v483 = vmul.f32 %v431, %v459
  %v484 = vmul.f32 %v432, %v459
  %v485 = vadd.f32 %v483, %v466
  %v486 = vadd.f32 %v484, %v466
  %vm487 = vcmp.ge.f32.partialorder %v485, 0.0
  %vm488 = vcmp.ge.f32.partialorder %v486, 0.0
  %v489 = vmul.f32 %v472, %v485
  %v490 = vmul.f32 %v472, %v486
  %v491 = vsel %vm487, %v485, %v489
  %v492 = vsel %vm488, %v486, %v490
  %v495 = vrot.slane %v492, 4
  %v496 = vsel %vm63, %v491, %v495
  %s498 = scalar_lea.vmem %s6, 8
  %499 = vst [vmem:[%s498] sm:$0xff] %v496
  %v500 = vld [vmem:[%s1] sm:$0xff]
  %v501 = vld [vmem:[%s1 + $0x8] sm:$0xff]
  %v502 = vld [vmem:[%s1 + $0x10] sm:$0xff]
  %v503 = vld [vmem:[%s1 + $0x18] sm:$0xf]
  %v504 = vld [vmem:[%s1 + $0x20] sm:$0xf]
  %v505 = vld [vmem:[%s1 + $0x28] sm:$0xf]
  %s506 = scalar_lea.vmem %s2, 12
  %v507 = vld [vmem:[%s506] sm:$0xf]
  %s508 = scalar_lea.vmem %s2, 16
  %v509 = vld [vmem:[%s508] sm:$0xf]
  %516 = vrot.lane.b32.xlu0 %v500, 80
  %v517 = vpop.permute.xlu0 %516
  %518 = vrot.lane.b32.xlu0 %v501, 80
  %v519 = vpop.permute.xlu0 %518
  %520 = vrot.lane.b32.xlu0 %v502, 80
  %v521 = vpop.permute.xlu0 %520
  %522 = vrot.lane.b32.xlu0 %v503, 80
  %v523 = vpop.permute.xlu0 %522
  %524 = vrot.lane.b32.xlu0 %v504, 80
  %v525 = vpop.permute.xlu0 %524
  %526 = vrot.lane.b32.xlu0 %v505, 80
  %v527 = vpop.permute.xlu0 %526
  %vm528 = vcmask 654336
  %v529 = vsel %vm528, %v517, %v519
  %v530 = vsel %vm528, %v519, %v521
  %v531 = vsel %vm528, %v523, %v525
  %v532 = vsel %vm528, %v525, %v527
  %v536 = vsel %vm59, %v509, 0
  %v538 = vsel %vm63, %v531, 0
  %v540 = vsel %vm63, %v532, 0
  %542 = vmatpush.msra.mxu0 0.0
  %543 = vmatpush.msra.mxu0 0.0
  %544 = vmatpush.msra.mxu0 0.0
  %545 = vmatpush.msra.mxu0 0.0
  %546 = vmatpush.msra.mxu0 0.0
  %547 = vmatpush.msra.mxu0 0.0
  %548 = vmatpush.msra.mxu0 0.0
  %549 = vmatpush.msra.mxu0 0.0
  %550 = vmatpush.msra.mxu0 0.0
  %551 = vmatpush.msra.mxu0 0.0
  %552 = vmatpush.msra.mxu0 0.0
  %553 = vmatpush.msra.mxu0 0.0
  %554 = vmatpush.msra.mxu0 0.0
  %555 = vmatpush.msra.mxu0 0.0
  %556 = vmatpush.msra.mxu0 %v538
  %557 = vmatpush.msra.mxu0 %v529
  %558 = vmatmul.f32.gmra.mxu0 %v536
  %v559 = vpop.f32.mrf.mxu0
  %v560 = vadd.f32 0.0, %v559
  %561 = vdwg.mxu0
  %562 = vmatpush.msra.mxu0 0.0
  %563 = vmatpush.msra.mxu0 0.0
  %564 = vmatpush.msra.mxu0 0.0
  %565 = vmatpush.msra.mxu0 0.0
  %566 = vmatpush.msra.mxu0 0.0
  %567 = vmatpush.msra.mxu0 0.0
  %568 = vmatpush.msra.mxu0 0.0
  %569 = vmatpush.msra.mxu0 0.0
  %570 = vmatpush.msra.mxu0 0.0
  %571 = vmatpush.msra.mxu0 0.0
  %572 = vmatpush.msra.mxu0 0.0
  %573 = vmatpush.msra.mxu0 0.0
  %574 = vmatpush.msra.mxu0 0.0
  %575 = vmatpush.msra.mxu0 0.0
  %576 = vmatpush.msra.mxu0 %v540
  %577 = vmatpush.msra.mxu0 %v530
  %578 = vmatmul.f32.gmra.mxu0 %v536
  %v579 = vpop.f32.mrf.mxu0
  %v580 = vadd.f32 0.0, %v579
  %581 = vdwg.mxu0
  %v583 = vsel %vm59, %v507, 0
  %v585 = vsel %vm63, %v503, 0
  %v587 = vsel %vm63, %v504, 0
  %589 = vmatpush.msra.mxu0 0.0
  %590 = vmatpush.msra.mxu0 0.0
  %591 = vmatpush.msra.mxu0 0.0
  %592 = vmatpush.msra.mxu0 0.0
  %593 = vmatpush.msra.mxu0 0.0
  %594 = vmatpush.msra.mxu0 0.0
  %595 = vmatpush.msra.mxu0 0.0
  %596 = vmatpush.msra.mxu0 0.0
  %597 = vmatpush.msra.mxu0 0.0
  %598 = vmatpush.msra.mxu0 0.0
  %599 = vmatpush.msra.mxu0 0.0
  %600 = vmatpush.msra.mxu0 0.0
  %601 = vmatpush.msra.mxu0 0.0
  %602 = vmatpush.msra.mxu0 0.0
  %603 = vmatpush.msra.mxu0 %v585
  %604 = vmatpush.msra.mxu0 %v500
  %605 = vmatmul.f32.gmra.mxu0 %v583
  %v606 = vpop.f32.mrf.mxu0
  %v607 = vadd.f32 %v560, %v606
  %608 = vdwg.mxu0
  %609 = vmatpush.msra.mxu0 0.0
  %610 = vmatpush.msra.mxu0 0.0
  %611 = vmatpush.msra.mxu0 0.0
  %612 = vmatpush.msra.mxu0 0.0
  %613 = vmatpush.msra.mxu0 0.0
  %614 = vmatpush.msra.mxu0 0.0
  %615 = vmatpush.msra.mxu0 0.0
  %616 = vmatpush.msra.mxu0 0.0
  %617 = vmatpush.msra.mxu0 0.0
  %618 = vmatpush.msra.mxu0 0.0
  %619 = vmatpush.msra.mxu0 0.0
  %620 = vmatpush.msra.mxu0 0.0
  %621 = vmatpush.msra.mxu0 0.0
  %622 = vmatpush.msra.mxu0 0.0
  %623 = vmatpush.msra.mxu0 %v587
  %624 = vmatpush.msra.mxu0 %v501
  %625 = vmatmul.f32.gmra.mxu0 %v583
  %v626 = vpop.f32.mrf.mxu0
  %v627 = vadd.f32 %v580, %v626
  %628 = vdwg.mxu0
  %s629 = scalar_lea.vmem %s2, 20
  %v630 = vld [vmem:[%s629] sm:$0xf]
  %631 = vrot.lane.b32.xlu0 %v500, 32
  %v632 = vpop.permute.xlu0 %631
  %633 = vrot.lane.b32.xlu0 %v501, 32
  %v634 = vpop.permute.xlu0 %633
  %635 = vrot.lane.b32.xlu0 %v502, 32
  %v636 = vpop.permute.xlu0 %635
  %637 = vrot.lane.b32.xlu0 %v503, 32
  %v638 = vpop.permute.xlu0 %637
  %639 = vrot.lane.b32.xlu0 %v504, 32
  %v640 = vpop.permute.xlu0 %639
  %641 = vrot.lane.b32.xlu0 %v505, 32
  %v642 = vpop.permute.xlu0 %641
  %vm643 = vcmask 261120
  %v644 = vsel %vm643, %v632, %v634
  %v645 = vsel %vm643, %v634, %v636
  %v646 = vsel %vm643, %v638, %v640
  %v647 = vsel %vm643, %v640, %v642
  %v651 = vsel %vm59, %v630, 0
  %v653 = vsel %vm63, %v646, 0
  %v655 = vsel %vm63, %v647, 0
  %657 = vmatpush.msra.mxu0 0.0
  %658 = vmatpush.msra.mxu0 0.0
  %659 = vmatpush.msra.mxu0 0.0
  %660 = vmatpush.msra.mxu0 0.0
  %661 = vmatpush.msra.mxu0 0.0
  %662 = vmatpush.msra.mxu0 0.0
  %663 = vmatpush.msra.mxu0 0.0
  %664 = vmatpush.msra.mxu0 0.0
  %665 = vmatpush.msra.mxu0 0.0
  %666 = vmatpush.msra.mxu0 0.0
  %667 = vmatpush.msra.mxu0 0.0
  %668 = vmatpush.msra.mxu0 0.0
  %669 = vmatpush.msra.mxu0 0.0
  %670 = vmatpush.msra.mxu0 0.0
  %671 = vmatpush.msra.mxu0 %v653
  %672 = vmatpush.msra.mxu0 %v644
  %673 = vmatmul.f32.gmra.mxu0 %v651
  %v674 = vpop.f32.mrf.mxu0
  %v675 = vadd.f32 0.0, %v674
  %676 = vdwg.mxu0
  %677 = vmatpush.msra.mxu0 0.0
  %678 = vmatpush.msra.mxu0 0.0
  %679 = vmatpush.msra.mxu0 0.0
  %680 = vmatpush.msra.mxu0 0.0
  %681 = vmatpush.msra.mxu0 0.0
  %682 = vmatpush.msra.mxu0 0.0
  %683 = vmatpush.msra.mxu0 0.0
  %684 = vmatpush.msra.mxu0 0.0
  %685 = vmatpush.msra.mxu0 0.0
  %686 = vmatpush.msra.mxu0 0.0
  %687 = vmatpush.msra.mxu0 0.0
  %688 = vmatpush.msra.mxu0 0.0
  %689 = vmatpush.msra.mxu0 0.0
  %690 = vmatpush.msra.mxu0 0.0
  %691 = vmatpush.msra.mxu0 %v655
  %692 = vmatpush.msra.mxu0 %v645
  %693 = vmatmul.f32.gmra.mxu0 %v651
  %v694 = vpop.f32.mrf.mxu0
  %v695 = vadd.f32 0.0, %v694
  %696 = vdwg.mxu0
  %v697 = vadd.f32 %v607, %v675
  %v698 = vadd.f32 %v627, %v695
  %s699 = scalar_lea.vmem %s1, 48
  %v700 = vld [vmem:[%s699] sm:$0xff]
  %v701 = vld [vmem:[%s699 + $0x8] sm:$0xff]
  %v702 = vld [vmem:[%s699 + $0x10] sm:$0xff]
  %v703 = vld [vmem:[%s699 + $0x18] sm:$0xf]
  %v704 = vld [vmem:[%s699 + $0x20] sm:$0xf]
  %v705 = vld [vmem:[%s699 + $0x28] sm:$0xf]
  %712 = vrot.lane.b32.xlu0 %v700, 80
  %v713 = vpop.permute.xlu0 %712
  %714 = vrot.lane.b32.xlu0 %v701, 80
  %v715 = vpop.permute.xlu0 %714
  %716 = vrot.lane.b32.xlu0 %v702, 80
  %v717 = vpop.permute.xlu0 %716
  %718 = vrot.lane.b32.xlu0 %v703, 80
  %v719 = vpop.permute.xlu0 %718
  %720 = vrot.lane.b32.xlu0 %v704, 80
  %v721 = vpop.permute.xlu0 %720
  %722 = vrot.lane.b32.xlu0 %v705, 80
  %v723 = vpop.permute.xlu0 %722
  %v724 = vsel %vm528, %v713, %v715
  %v725 = vsel %vm528, %v715, %v717
  %v726 = vsel %vm528, %v719, %v721
  %v727 = vsel %vm528, %v721, %v723
  %v730 = vsel %vm63, %v726, 0
  %v732 = vsel %vm63, %v727, 0
  %734 = vmatpush.msra.mxu0 0.0
  %735 = vmatpush.msra.mxu0 0.0
  %736 = vmatpush.msra.mxu0 0.0
  %737 = vmatpush.msra.mxu0 0.0
  %738 = vmatpush.msra.mxu0 0.0
  %739 = vmatpush.msra.mxu0 0.0
  %740 = vmatpush.msra.mxu0 0.0
  %741 = vmatpush.msra.mxu0 0.0
  %742 = vmatpush.msra.mxu0 0.0
  %743 = vmatpush.msra.mxu0 0.0
  %744 = vmatpush.msra.mxu0 0.0
  %745 = vmatpush.msra.mxu0 0.0
  %746 = vmatpush.msra.mxu0 0.0
  %747 = vmatpush.msra.mxu0 0.0
  %748 = vmatpush.msra.mxu0 %v730
  %749 = vmatpush.msra.mxu0 %v724
  %750 = vmatmul.f32.gmra.mxu0 %v536
  %v751 = vpop.f32.mrf.mxu0
  %v752 = vadd.f32 0.0, %v751
  %753 = vdwg.mxu0
  %754 = vmatpush.msra.mxu0 0.0
  %755 = vmatpush.msra.mxu0 0.0
  %756 = vmatpush.msra.mxu0 0.0
  %757 = vmatpush.msra.mxu0 0.0
  %758 = vmatpush.msra.mxu0 0.0
  %759 = vmatpush.msra.mxu0 0.0
  %760 = vmatpush.msra.mxu0 0.0
  %761 = vmatpush.msra.mxu0 0.0
  %762 = vmatpush.msra.mxu0 0.0
  %763 = vmatpush.msra.mxu0 0.0
  %764 = vmatpush.msra.mxu0 0.0
  %765 = vmatpush.msra.mxu0 0.0
  %766 = vmatpush.msra.mxu0 0.0
  %767 = vmatpush.msra.mxu0 0.0
  %768 = vmatpush.msra.mxu0 %v732
  %769 = vmatpush.msra.mxu0 %v725
  %770 = vmatmul.f32.gmra.mxu0 %v536
  %v771 = vpop.f32.mrf.mxu0
  %v772 = vadd.f32 0.0, %v771
  %773 = vdwg.mxu0
  %v774 = vsel %vm63, %v703, 0
  %v776 = vsel %vm63, %v704, 0
  %778 = vmatpush.msra.mxu0 0.0
  %779 = vmatpush.msra.mxu0 0.0
  %780 = vmatpush.msra.mxu0 0.0
  %781 = vmatpush.msra.mxu0 0.0
  %782 = vmatpush.msra.mxu0 0.0
  %783 = vmatpush.msra.mxu0 0.0
  %784 = vmatpush.msra.mxu0 0.0
  %785 = vmatpush.msra.mxu0 0.0
  %786 = vmatpush.msra.mxu0 0.0
  %787 = vmatpush.msra.mxu0 0.0
  %788 = vmatpush.msra.mxu0 0.0
  %789 = vmatpush.msra.mxu0 0.0
  %790 = vmatpush.msra.mxu0 0.0
  %791 = vmatpush.msra.mxu0 0.0
  %792 = vmatpush.msra.mxu0 %v774
  %793 = vmatpush.msra.mxu0 %v700
  %794 = vmatmul.f32.gmra.mxu0 %v583
  %v795 = vpop.f32.mrf.mxu0
  %v796 = vadd.f32 %v752, %v795
  %797 = vdwg.mxu0
  %798 = vmatpush.msra.mxu0 0.0
  %799 = vmatpush.msra.mxu0 0.0
  %800 = vmatpush.msra.mxu0 0.0
  %801 = vmatpush.msra.mxu0 0.0
  %802 = vmatpush.msra.mxu0 0.0
  %803 = vmatpush.msra.mxu0 0.0
  %804 = vmatpush.msra.mxu0 0.0
  %805 = vmatpush.msra.mxu0 0.0
  %806 = vmatpush.msra.mxu0 0.0
  %807 = vmatpush.msra.mxu0 0.0
  %808 = vmatpush.msra.mxu0 0.0
  %809 = vmatpush.msra.mxu0 0.0
  %810 = vmatpush.msra.mxu0 0.0
  %811 = vmatpush.msra.mxu0 0.0
  %812 = vmatpush.msra.mxu0 %v776
  %813 = vmatpush.msra.mxu0 %v701
  %814 = vmatmul.f32.gmra.mxu0 %v583
  %v815 = vpop.f32.mrf.mxu0
  %v816 = vadd.f32 %v772, %v815
  %817 = vdwg.mxu0
  %818 = vrot.lane.b32.xlu0 %v700, 32
  %v819 = vpop.permute.xlu0 %818
  %820 = vrot.lane.b32.xlu0 %v701, 32
  %v821 = vpop.permute.xlu0 %820
  %822 = vrot.lane.b32.xlu0 %v702, 32
  %v823 = vpop.permute.xlu0 %822
  %824 = vrot.lane.b32.xlu0 %v703, 32
  %v825 = vpop.permute.xlu0 %824
  %826 = vrot.lane.b32.xlu0 %v704, 32
  %v827 = vpop.permute.xlu0 %826
  %828 = vrot.lane.b32.xlu0 %v705, 32
  %v829 = vpop.permute.xlu0 %828
  %v830 = vsel %vm643, %v819, %v821
  %v831 = vsel %vm643, %v821, %v823
  %v832 = vsel %vm643, %v825, %v827
  %v833 = vsel %vm643, %v827, %v829
  %v836 = vsel %vm63, %v832, 0
  %v838 = vsel %vm63, %v833, 0
  %840 = vmatpush.msra.mxu0 0.0
  %841 = vmatpush.msra.mxu0 0.0
  %842 = vmatpush.msra.mxu0 0.0
  %843 = vmatpush.msra.mxu0 0.0
  %844 = vmatpush.msra.mxu0 0.0
  %845 = vmatpush.msra.mxu0 0.0
  %846 = vmatpush.msra.mxu0 0.0
  %847 = vmatpush.msra.mxu0 0.0
  %848 = vmatpush.msra.mxu0 0.0
  %849 = vmatpush.msra.mxu0 0.0
  %850 = vmatpush.msra.mxu0 0.0
  %851 = vmatpush.msra.mxu0 0.0
  %852 = vmatpush.msra.mxu0 0.0
  %853 = vmatpush.msra.mxu0 0.0
  %854 = vmatpush.msra.mxu0 %v836
  %855 = vmatpush.msra.mxu0 %v830
  %856 = vmatmul.f32.gmra.mxu0 %v651
  %v857 = vpop.f32.mrf.mxu0
  %v858 = vadd.f32 0.0, %v857
  %859 = vdwg.mxu0
  %860 = vmatpush.msra.mxu0 0.0
  %861 = vmatpush.msra.mxu0 0.0
  %862 = vmatpush.msra.mxu0 0.0
  %863 = vmatpush.msra.mxu0 0.0
  %864 = vmatpush.msra.mxu0 0.0
  %865 = vmatpush.msra.mxu0 0.0
  %866 = vmatpush.msra.mxu0 0.0
  %867 = vmatpush.msra.mxu0 0.0
  %868 = vmatpush.msra.mxu0 0.0
  %869 = vmatpush.msra.mxu0 0.0
  %870 = vmatpush.msra.mxu0 0.0
  %871 = vmatpush.msra.mxu0 0.0
  %872 = vmatpush.msra.mxu0 0.0
  %873 = vmatpush.msra.mxu0 0.0
  %874 = vmatpush.msra.mxu0 %v838
  %875 = vmatpush.msra.mxu0 %v831
  %876 = vmatmul.f32.gmra.mxu0 %v651
  %v877 = vpop.f32.mrf.mxu0
  %v878 = vadd.f32 0.0, %v877
  %879 = vdwg.mxu0
  %v880 = vadd.f32 %v796, %v858
  %v881 = vadd.f32 %v816, %v878
  %v882 = vsel %vm63, %v697, 0.0
  %v883 = vsel %vm63, %v698, 0.0
  %v884 = vadd.f32 %v882, %v883
  %885 = vadd.xlane.f32.xlu0 %v884
  %v886 = vpop.xlane.xlu0 %885
  %v887 = vadd.f32 %v886, 0.0
  %v888 = vsel %vm63, %v880, 0.0
  %v889 = vsel %vm63, %v881, 0.0
  %v890 = vadd.f32 %v888, %v889
  %891 = vadd.xlane.f32.xlu0 %v890
  %v892 = vpop.xlane.xlu0 %891
  %v893 = vadd.f32 %v887, %v892
  %v894 = vmul.f32 %v893, 0.001953125
  %v895 = vsub.f32 %v697, %v894
  %v896 = vsub.f32 %v698, %v894
  %v897 = vmul.f32 %v895, %v895
  %v898 = vmul.f32 %v896, %v896
  %v899 = vsel %vm63, %v897, 0.0
  %v900 = vsel %vm63, %v898, 0.0
  %v901 = vadd.f32 %v899, %v900
  %902 = vadd.xlane.f32.xlu0 %v901
  %v903 = vpop.xlane.xlu0 %902
  %v904 = vadd.f32 %v903, 0.0
  %v905 = vsub.f32 %v880, %v894
  %v906 = vsub.f32 %v881, %v894
  %v907 = vmul.f32 %v905, %v905
  %v908 = vmul.f32 %v906, %v906
  %v909 = vsel %vm63, %v907, 0.0
  %v910 = vsel %vm63, %v908, 0.0
  %v911 = vadd.f32 %v909, %v910
  %912 = vadd.xlane.f32.xlu0 %v911
  %v913 = vpop.xlane.xlu0 %912
  %v914 = vadd.f32 %v904, %v913
  %v915 = vmul.f32 %v914, 0.001953125
  %v916 = vadd.f32 %v915, 1e-05
  %v917 = vrsqrt.pop %v916
  %v918 = vmul.f32 %v917, %v916
  %v919 = vmul.f32 %v918, %v917
  %v920 = vmul.f32 0.5, %v919
  %v921 = vsub.f32 1.5, %v920
  %v922 = vmul.f32 %v917, %v921
  %vm923 = vweird.f32 %v916
  %vm924 = vweird.f32 %v917
  %vm925 = vmor %vm923, %vm924
  %v926 = vsel %vm925, %v917, %v922
  %s927 = scalar_lea.vmem %s3, 4
  %v928 = vld [vmem:[%s927] sm:$0xf]
  %v929 = vmul.f32 %v926, %v928
  %s930 = scalar_lea.vmem %s4, 4
  %v931 = vld [vmem:[%s930] sm:$0xf]
  %933 = vset.pattern.permute.xlu0 0
  %934 = vperm.xlu0 %933, %v929
  %v935 = vpop.permute.xlu0 %934
  %v937 = vmul.f32 %v895, %v935
  %v938 = vmul.f32 %v896, %v935
  %940 = vset.pattern.permute.xlu0 0
  %941 = vperm.xlu0 %940, %v931
  %v942 = vpop.permute.xlu0 %941
  %v944 = vadd.f32 %v937, %v942
  %v945 = vadd.f32 %v938, %v942
  %vm946 = vcmp.ge.f32.partialorder %v944, 0.0
  %vm947 = vcmp.ge.f32.partialorder %v945, 0.0
  %v948 = vmul.f32 %v472, %v944
  %v949 = vmul.f32 %v472, %v945
  %v950 = vsel %vm946, %v944, %v948
  %v951 = vsel %vm947, %v945, %v949
  %v954 = vrot.slane %v951, 4
  %v955 = vsel %vm63, %v950, %v954
  %s957 = scalar_lea.vmem %s6, 16
  %958 = vst [vmem:[%s957] sm:$0xff] %v955
  %v959 = vmul.f32 %v905, %v935
  %v960 = vmul.f32 %v906, %v935
  %v961 = vadd.f32 %v959, %v942
  %v962 = vadd.f32 %v960, %v942
  %vm963 = vcmp.ge.f32.partialorder %v961, 0.0
  %vm964 = vcmp.ge.f32.partialorder %v962, 0.0
  %v965 = vmul.f32 %v472, %v961
  %v966 = vmul.f32 %v472, %v962
  %v967 = vsel %vm963, %v961, %v965
  %v968 = vsel %vm964, %v962, %v966
  %v971 = vrot.slane %v968, 4
  %v972 = vsel %vm63, %v967, %v971
  %s974 = scalar_lea.vmem %s6, 24
  %975 = vst [vmem:[%s974] sm:$0xff] %v972
  // Predicated region
  $region26: #{inception_block_forward.2} parent=0 // pred_check
    _
  $region27: #{inception_block_forward.2} parent=0 // pred_check_branch
    %977 = sbr.rel (0) target = $region29
  $region28: #{inception_block_forward.2} parent=0 // pred_region
    _
  $region29: #{inception_block_forward.2} parent=0 // pred_fallthru
    _
  // Predicated region
  $region30: #{inception_block_forward.2} parent=0 // pred_check
    _
  $region31: #{inception_block_forward.2} parent=0 // pred_check_branch
    %979 = sbr.rel (0) target = $region33
  $region32: #{inception_block_forward.2} parent=0 // pred_region
    _
  $region33: #{inception_block_forward.2} parent=0 // pred_fallthru
    _

// kernel: inception_block_forward.3
$region0: #{inception_block_forward.3}
  #allocation0 [shape = 'u32[]', space=smem, size = 0x4, offset = 0x4, fixed_abs, tag = 'smem constant byte address 0x4 - core index']
  #allocation1 [shape = 'u32[72,128]{1,0:T(1,128)}', space=vmem, size = 0x9000, scoped, tag = 'internal scratch']
  #allocation2 [shape = 'f32[1]{0:T(128)S(6)}', space=smem, size = 0x200, scoped, tag = 'scoped memory for inception_block_forward.3']
  %s0 = inlined_call_operand.vmem [shape: f32[2,24,288], index: 0, kind: input, shape index: {}]
  %s1 = inlined_call_operand.vmem [shape: f32[2,4,256], index: 1, kind: input, shape index: {}]
  %s2 = inlined_call_operand.vmem [shape: f32[3,4,24], index: 2, kind: input, shape index: {}]
  %s3 = inlined_call_operand.vmem [shape: f32[4,1], index: 3, kind: input, shape index: {}]
  %s4 = inlined_call_operand.vmem [shape: f32[4,1], index: 4, kind: input, shape index: {}]
  %s5 = inlined_call_operand.<no memory space> [shape: f32[1], index: 5, kind: input, shape index: {}]
  %s6 = inlined_call_operand.vmem [shape: f32[2,4,256], index: 6, kind: output, shape index: {}]
  %s7 = sld [smem:[#allocation0]]
  $region34: #{inception_block_forward.3} parent=0
    _
  %s9 = ssub.s32 1, %s7
  %s10 = scalar_select 0, %s9, %s7
  %11 = sst [smem:[#allocation2]] %s5
  // Predicated region
  $region2: #{inception_block_forward.3} parent=0 // pred_check
    _
  $region3: #{inception_block_forward.3} parent=0 // pred_check_branch
    %13 = sbr.rel (0) target = $region5
  $region4: #{inception_block_forward.3} parent=0 // pred_region
    _
  $region5: #{inception_block_forward.3} parent=0 // pred_fallthru
    _
  // Predicated region
  $region6: #{inception_block_forward.3} parent=0 // pred_check
    _
  $region7: #{inception_block_forward.3} parent=0 // pred_check_branch
    %15 = sbr.rel (0) target = $region9
  $region8: #{inception_block_forward.3} parent=0 // pred_region
    _
  $region9: #{inception_block_forward.3} parent=0 // pred_fallthru
    _
  // Predicated region
  $region10: #{inception_block_forward.3} parent=0 // pred_check
    _
  $region11: #{inception_block_forward.3} parent=0 // pred_check_branch
    %17 = sbr.rel (0) target = $region13
  $region12: #{inception_block_forward.3} parent=0 // pred_region
    _
  $region13: #{inception_block_forward.3} parent=0 // pred_fallthru
    _
  // Predicated region
  $region14: #{inception_block_forward.3} parent=0 // pred_check
    _
  $region15: #{inception_block_forward.3} parent=0 // pred_check_branch
    %19 = sbr.rel (0) target = $region17
  $region16: #{inception_block_forward.3} parent=0 // pred_region
    _
  $region17: #{inception_block_forward.3} parent=0 // pred_fallthru
    _
  // Predicated region
  $region18: #{inception_block_forward.3} parent=0 // pred_check
    _
  $region19: #{inception_block_forward.3} parent=0 // pred_check_branch
    %21 = sbr.rel (0) target = $region21
  $region20: #{inception_block_forward.3} parent=0 // pred_region
    _
  $region21: #{inception_block_forward.3} parent=0 // pred_fallthru
    _
  // Predicated region
  $region22: #{inception_block_forward.3} parent=0 // pred_check
    _
  $region23: #{inception_block_forward.3} parent=0 // pred_check_branch
    %23 = sbr.rel (0) target = $region25
  $region24: #{inception_block_forward.3} parent=0 // pred_region
    _
  $region25: #{inception_block_forward.3} parent=0 // pred_fallthru
    _
  %s24 = sld [smem:[#allocation2]]
  %v25 = vld [vmem:[%s0] sm:$0xff]
  %v26 = vld [vmem:[%s0 + $0x8] sm:$0xff]
  %v27 = vld [vmem:[%s0 + $0x10] sm:$0xff]
  %v28 = vld [vmem:[%s0 + $0x18] sm:$0xff]
  %v29 = vld [vmem:[%s0 + $0x20] sm:$0xff]
  %v30 = vld [vmem:[%s0 + $0x28] sm:$0xff]
  %v31 = vld [vmem:[%s0 + $0x30] sm:$0xff]
  %v32 = vld [vmem:[%s0 + $0x38] sm:$0xff]
  %v33 = vld [vmem:[%s0 + $0x40] sm:$0xff]
  %v34 = vld [vmem:[%s2] sm:$0xf]
  %s35 = scalar_lea.vmem %s2, 4
  %v36 = vld [vmem:[%s35] sm:$0xf]
  %46 = vrot.lane.b32.xlu0 %v25, 112
  %v47 = vpop.permute.xlu0 %46
  %48 = vrot.lane.b32.xlu0 %v26, 112
  %v49 = vpop.permute.xlu0 %48
  %50 = vrot.lane.b32.xlu0 %v27, 112
  %v51 = vpop.permute.xlu0 %50
  %52 = vrot.lane.b32.xlu0 %v28, 112
  %v53 = vpop.permute.xlu0 %52
  %54 = vrot.lane.b32.xlu0 %v29, 112
  %v55 = vpop.permute.xlu0 %54
  %56 = vrot.lane.b32.xlu0 %v30, 112
  %v57 = vpop.permute.xlu0 %56
  %58 = vrot.lane.b32.xlu0 %v31, 112
  %v59 = vpop.permute.xlu0 %58
  %60 = vrot.lane.b32.xlu0 %v32, 112
  %v61 = vpop.permute.xlu0 %60
  %62 = vrot.lane.b32.xlu0 %v33, 112
  %v63 = vpop.permute.xlu0 %62
  %vm64 = vcmask 916480
  %v65 = vsel %vm64, %v47, %v49
  %v66 = vsel %vm64, %v49, %v51
  %v67 = vsel %vm64, %v53, %v55
  %v68 = vsel %vm64, %v55, %v57
  %v69 = vsel %vm64, %v59, %v61
  %v70 = vsel %vm64, %v61, %v63
  %vm77 = vcmask 195584
  %v79 = vsel %vm77, %v36, 0
  %81 = vmatpush.msra.mxu0 0.0
  %82 = vmatpush.msra.mxu0 0.0
  %83 = vmatpush.msra.mxu0 0.0
  %84 = vmatpush.msra.mxu0 0.0
  %85 = vmatpush.msra.mxu0 0.0
  %86 = vmatpush.msra.mxu0 0.0
  %87 = vmatpush.msra.mxu0 0.0
  %88 = vmatpush.msra.mxu0 0.0
  %89 = vmatpush.msra.mxu0 0.0
  %90 = vmatpush.msra.mxu0 0.0
  %91 = vmatpush.msra.mxu0 0.0
  %92 = vmatpush.msra.mxu0 0.0
  %93 = vmatpush.msra.mxu0 0.0
  %94 = vmatpush.msra.mxu0 %v69
  %95 = vmatpush.msra.mxu0 %v67
  %96 = vmatpush.msra.mxu0 %v65
  %97 = vmatmul.f32.gmra.mxu0 %v79
  %v98 = vpop.f32.mrf.mxu0
  %v99 = vadd.f32 0.0, %v98
  %100 = vdwg.mxu0
  %101 = vmatpush.msra.mxu0 0.0
  %102 = vmatpush.msra.mxu0 0.0
  %103 = vmatpush.msra.mxu0 0.0
  %104 = vmatpush.msra.mxu0 0.0
  %105 = vmatpush.msra.mxu0 0.0
  %106 = vmatpush.msra.mxu0 0.0
  %107 = vmatpush.msra.mxu0 0.0
  %108 = vmatpush.msra.mxu0 0.0
  %109 = vmatpush.msra.mxu0 0.0
  %110 = vmatpush.msra.mxu0 0.0
  %111 = vmatpush.msra.mxu0 0.0
  %112 = vmatpush.msra.mxu0 0.0
  %113 = vmatpush.msra.mxu0 0.0
  %114 = vmatpush.msra.mxu0 %v70
  %115 = vmatpush.msra.mxu0 %v68
  %116 = vmatpush.msra.mxu0 %v66
  %117 = vmatmul.f32.gmra.mxu0 %v79
  %v118 = vpop.f32.mrf.mxu0
  %v119 = vadd.f32 0.0, %v118
  %120 = vdwg.mxu0
  %v122 = vsel %vm77, %v34, 0
  %124 = vmatpush.msra.mxu0 0.0
  %125 = vmatpush.msra.mxu0 0.0
  %126 = vmatpush.msra.mxu0 0.0
  %127 = vmatpush.msra.mxu0 0.0
  %128 = vmatpush.msra.mxu0 0.0
  %129 = vmatpush.msra.mxu0 0.0
  %130 = vmatpush.msra.mxu0 0.0
  %131 = vmatpush.msra.mxu0 0.0
  %132 = vmatpush.msra.mxu0 0.0
  %133 = vmatpush.msra.mxu0 0.0
  %134 = vmatpush.msra.mxu0 0.0
  %135 = vmatpush.msra.mxu0 0.0
  %136 = vmatpush.msra.mxu0 0.0
  %137 = vmatpush.msra.mxu0 %v31
  %138 = vmatpush.msra.mxu0 %v28
  %139 = vmatpush.msra.mxu0 %v25
  %140 = vmatmul.f32.gmra.mxu0 %v122
  %v141 = vpop.f32.mrf.mxu0
  %v142 = vadd.f32 %v99, %v141
  %143 = vdwg.mxu0
  %144 = vmatpush.msra.mxu0 0.0
  %145 = vmatpush.msra.mxu0 0.0
  %146 = vmatpush.msra.mxu0 0.0
  %147 = vmatpush.msra.mxu0 0.0
  %148 = vmatpush.msra.mxu0 0.0
  %149 = vmatpush.msra.mxu0 0.0
  %150 = vmatpush.msra.mxu0 0.0
  %151 = vmatpush.msra.mxu0 0.0
  %152 = vmatpush.msra.mxu0 0.0
  %153 = vmatpush.msra.mxu0 0.0
  %154 = vmatpush.msra.mxu0 0.0
  %155 = vmatpush.msra.mxu0 0.0
  %156 = vmatpush.msra.mxu0 0.0
  %157 = vmatpush.msra.mxu0 %v32
  %158 = vmatpush.msra.mxu0 %v29
  %159 = vmatpush.msra.mxu0 %v26
  %160 = vmatmul.f32.gmra.mxu0 %v122
  %v161 = vpop.f32.mrf.mxu0
  %v162 = vadd.f32 %v119, %v161
  %163 = vdwg.mxu0
  %s164 = scalar_lea.vmem %s2, 8
  %v165 = vld [vmem:[%s164] sm:$0xf]
  %166 = vrot.lane.b32.xlu0 %v25, 96
  %v167 = vpop.permute.xlu0 %166
  %168 = vrot.lane.b32.xlu0 %v26, 96
  %v169 = vpop.permute.xlu0 %168
  %170 = vrot.lane.b32.xlu0 %v27, 96
  %v171 = vpop.permute.xlu0 %170
  %172 = vrot.lane.b32.xlu0 %v28, 96
  %v173 = vpop.permute.xlu0 %172
  %174 = vrot.lane.b32.xlu0 %v29, 96
  %v175 = vpop.permute.xlu0 %174
  %176 = vrot.lane.b32.xlu0 %v30, 96
  %v177 = vpop.permute.xlu0 %176
  %178 = vrot.lane.b32.xlu0 %v31, 96
  %v179 = vpop.permute.xlu0 %178
  %180 = vrot.lane.b32.xlu0 %v32, 96
  %v181 = vpop.permute.xlu0 %180
  %182 = vrot.lane.b32.xlu0 %v33, 96
  %v183 = vpop.permute.xlu0 %182
  %vm184 = vcmask 785408
  %v185 = vsel %vm184, %v167, %v169
  %v186 = vsel %vm184, %v169, %v171
  %v187 = vsel %vm184, %v173, %v175
  %v188 = vsel %vm184, %v175, %v177
  %v189 = vsel %vm184, %v179, %v181
  %v190 = vsel %vm184, %v181, %v183
  %v198 = vsel %vm77, %v165, 0
  %200 = vmatpush.msra.mxu0 0.0
  %201 = vmatpush.msra.mxu0 0.0
  %202 = vmatpush.msra.mxu0 0.0
  %203 = vmatpush.msra.mxu0 0.0
  %204 = vmatpush.msra.mxu0 0.0
  %205 = vmatpush.msra.mxu0 0.0
  %206 = vmatpush.msra.mxu0 0.0
  %207 = vmatpush.msra.mxu0 0.0
  %208 = vmatpush.msra.mxu0 0.0
  %209 = vmatpush.msra.mxu0 0.0
  %210 = vmatpush.msra.mxu0 0.0
  %211 = vmatpush.msra.mxu0 0.0
  %212 = vmatpush.msra.mxu0 0.0
  %213 = vmatpush.msra.mxu0 %v189
  %214 = vmatpush.msra.mxu0 %v187
  %215 = vmatpush.msra.mxu0 %v185
  %216 = vmatmul.f32.gmra.mxu0 %v198
  %v217 = vpop.f32.mrf.mxu0
  %v218 = vadd.f32 0.0, %v217
  %219 = vdwg.mxu0
  %220 = vmatpush.msra.mxu0 0.0
  %221 = vmatpush.msra.mxu0 0.0
  %222 = vmatpush.msra.mxu0 0.0
  %223 = vmatpush.msra.mxu0 0.0
  %224 = vmatpush.msra.mxu0 0.0
  %225 = vmatpush.msra.mxu0 0.0
  %226 = vmatpush.msra.mxu0 0.0
  %227 = vmatpush.msra.mxu0 0.0
  %228 = vmatpush.msra.mxu0 0.0
  %229 = vmatpush.msra.mxu0 0.0
  %230 = vmatpush.msra.mxu0 0.0
  %231 = vmatpush.msra.mxu0 0.0
  %232 = vmatpush.msra.mxu0 0.0
  %233 = vmatpush.msra.mxu0 %v190
  %234 = vmatpush.msra.mxu0 %v188
  %235 = vmatpush.msra.mxu0 %v186
  %236 = vmatmul.f32.gmra.mxu0 %v198
  %v237 = vpop.f32.mrf.mxu0
  %v238 = vadd.f32 0.0, %v237
  %239 = vdwg.mxu0
  %v240 = vadd.f32 %v142, %v218
  %v241 = vadd.f32 %v162, %v238
  %s242 = scalar_lea.vmem %s0, 72
  %v243 = vld [vmem:[%s242] sm:$0xff]
  %v244 = vld [vmem:[%s242 + $0x8] sm:$0xff]
  %v245 = vld [vmem:[%s242 + $0x10] sm:$0xff]
  %v246 = vld [vmem:[%s242 + $0x18] sm:$0xff]
  %v247 = vld [vmem:[%s242 + $0x20] sm:$0xff]
  %v248 = vld [vmem:[%s242 + $0x28] sm:$0xff]
  %v249 = vld [vmem:[%s242 + $0x30] sm:$0xff]
  %v250 = vld [vmem:[%s242 + $0x38] sm:$0xff]
  %v251 = vld [vmem:[%s242 + $0x40] sm:$0xff]
  %261 = vrot.lane.b32.xlu0 %v243, 112
  %v262 = vpop.permute.xlu0 %261
  %263 = vrot.lane.b32.xlu0 %v244, 112
  %v264 = vpop.permute.xlu0 %263
  %265 = vrot.lane.b32.xlu0 %v245, 112
  %v266 = vpop.permute.xlu0 %265
  %267 = vrot.lane.b32.xlu0 %v246, 112
  %v268 = vpop.permute.xlu0 %267
  %269 = vrot.lane.b32.xlu0 %v247, 112
  %v270 = vpop.permute.xlu0 %269
  %271 = vrot.lane.b32.xlu0 %v248, 112
  %v272 = vpop.permute.xlu0 %271
  %273 = vrot.lane.b32.xlu0 %v249, 112
  %v274 = vpop.permute.xlu0 %273
  %275 = vrot.lane.b32.xlu0 %v250, 112
  %v276 = vpop.permute.xlu0 %275
  %277 = vrot.lane.b32.xlu0 %v251, 112
  %v278 = vpop.permute.xlu0 %277
  %v279 = vsel %vm64, %v262, %v264
  %v280 = vsel %vm64, %v264, %v266
  %v281 = vsel %vm64, %v268, %v270
  %v282 = vsel %vm64, %v270, %v272
  %v283 = vsel %vm64, %v274, %v276
  %v284 = vsel %vm64, %v276, %v278
  %291 = vmatpush.msra.mxu0 0.0
  %292 = vmatpush.msra.mxu0 0.0
  %293 = vmatpush.msra.mxu0 0.0
  %294 = vmatpush.msra.mxu0 0.0
  %295 = vmatpush.msra.mxu0 0.0
  %296 = vmatpush.msra.mxu0 0.0
  %297 = vmatpush.msra.mxu0 0.0
  %298 = vmatpush.msra.mxu0 0.0
  %299 = vmatpush.msra.mxu0 0.0
  %300 = vmatpush.msra.mxu0 0.0
  %301 = vmatpush.msra.mxu0 0.0
  %302 = vmatpush.msra.mxu0 0.0
  %303 = vmatpush.msra.mxu0 0.0
  %304 = vmatpush.msra.mxu0 %v283
  %305 = vmatpush.msra.mxu0 %v281
  %306 = vmatpush.msra.mxu0 %v279
  %307 = vmatmul.f32.gmra.mxu0 %v79
  %v308 = vpop.f32.mrf.mxu0
  %v309 = vadd.f32 0.0, %v308
  %310 = vdwg.mxu0
  %311 = vmatpush.msra.mxu0 0.0
  %312 = vmatpush.msra.mxu0 0.0
  %313 = vmatpush.msra.mxu0 0.0
  %314 = vmatpush.msra.mxu0 0.0
  %315 = vmatpush.msra.mxu0 0.0
  %316 = vmatpush.msra.mxu0 0.0
  %317 = vmatpush.msra.mxu0 0.0
  %318 = vmatpush.msra.mxu0 0.0
  %319 = vmatpush.msra.mxu0 0.0
  %320 = vmatpush.msra.mxu0 0.0
  %321 = vmatpush.msra.mxu0 0.0
  %322 = vmatpush.msra.mxu0 0.0
  %323 = vmatpush.msra.mxu0 0.0
  %324 = vmatpush.msra.mxu0 %v284
  %325 = vmatpush.msra.mxu0 %v282
  %326 = vmatpush.msra.mxu0 %v280
  %327 = vmatmul.f32.gmra.mxu0 %v79
  %v328 = vpop.f32.mrf.mxu0
  %v329 = vadd.f32 0.0, %v328
  %330 = vdwg.mxu0
  %331 = vmatpush.msra.mxu0 0.0
  %332 = vmatpush.msra.mxu0 0.0
  %333 = vmatpush.msra.mxu0 0.0
  %334 = vmatpush.msra.mxu0 0.0
  %335 = vmatpush.msra.mxu0 0.0
  %336 = vmatpush.msra.mxu0 0.0
  %337 = vmatpush.msra.mxu0 0.0
  %338 = vmatpush.msra.mxu0 0.0
  %339 = vmatpush.msra.mxu0 0.0
  %340 = vmatpush.msra.mxu0 0.0
  %341 = vmatpush.msra.mxu0 0.0
  %342 = vmatpush.msra.mxu0 0.0
  %343 = vmatpush.msra.mxu0 0.0
  %344 = vmatpush.msra.mxu0 %v249
  %345 = vmatpush.msra.mxu0 %v246
  %346 = vmatpush.msra.mxu0 %v243
  %347 = vmatmul.f32.gmra.mxu0 %v122
  %v348 = vpop.f32.mrf.mxu0
  %v349 = vadd.f32 %v309, %v348
  %350 = vdwg.mxu0
  %351 = vmatpush.msra.mxu0 0.0
  %352 = vmatpush.msra.mxu0 0.0
  %353 = vmatpush.msra.mxu0 0.0
  %354 = vmatpush.msra.mxu0 0.0
  %355 = vmatpush.msra.mxu0 0.0
  %356 = vmatpush.msra.mxu0 0.0
  %357 = vmatpush.msra.mxu0 0.0
  %358 = vmatpush.msra.mxu0 0.0
  %359 = vmatpush.msra.mxu0 0.0
  %360 = vmatpush.msra.mxu0 0.0
  %361 = vmatpush.msra.mxu0 0.0
  %362 = vmatpush.msra.mxu0 0.0
  %363 = vmatpush.msra.mxu0 0.0
  %364 = vmatpush.msra.mxu0 %v250
  %365 = vmatpush.msra.mxu0 %v247
  %366 = vmatpush.msra.mxu0 %v244
  %367 = vmatmul.f32.gmra.mxu0 %v122
  %v368 = vpop.f32.mrf.mxu0
  %v369 = vadd.f32 %v329, %v368
  %370 = vdwg.mxu0
  %371 = vrot.lane.b32.xlu0 %v243, 96
  %v372 = vpop.permute.xlu0 %371
  %373 = vrot.lane.b32.xlu0 %v244, 96
  %v374 = vpop.permute.xlu0 %373
  %375 = vrot.lane.b32.xlu0 %v245, 96
  %v376 = vpop.permute.xlu0 %375
  %377 = vrot.lane.b32.xlu0 %v246, 96
  %v378 = vpop.permute.xlu0 %377
  %379 = vrot.lane.b32.xlu0 %v247, 96
  %v380 = vpop.permute.xlu0 %379
  %381 = vrot.lane.b32.xlu0 %v248, 96
  %v382 = vpop.permute.xlu0 %381
  %383 = vrot.lane.b32.xlu0 %v249, 96
  %v384 = vpop.permute.xlu0 %383
  %385 = vrot.lane.b32.xlu0 %v250, 96
  %v386 = vpop.permute.xlu0 %385
  %387 = vrot.lane.b32.xlu0 %v251, 96
  %v388 = vpop.permute.xlu0 %387
  %v389 = vsel %vm184, %v372, %v374
  %v390 = vsel %vm184, %v374, %v376
  %v391 = vsel %vm184, %v378, %v380
  %v392 = vsel %vm184, %v380, %v382
  %v393 = vsel %vm184, %v384, %v386
  %v394 = vsel %vm184, %v386, %v388
  %401 = vmatpush.msra.mxu0 0.0
  %402 = vmatpush.msra.mxu0 0.0
  %403 = vmatpush.msra.mxu0 0.0
  %404 = vmatpush.msra.mxu0 0.0
  %405 = vmatpush.msra.mxu0 0.0
  %406 = vmatpush.msra.mxu0 0.0
  %407 = vmatpush.msra.mxu0 0.0
  %408 = vmatpush.msra.mxu0 0.0
  %409 = vmatpush.msra.mxu0 0.0
  %410 = vmatpush.msra.mxu0 0.0
  %411 = vmatpush.msra.mxu0 0.0
  %412 = vmatpush.msra.mxu0 0.0
  %413 = vmatpush.msra.mxu0 0.0
  %414 = vmatpush.msra.mxu0 %v393
  %415 = vmatpush.msra.mxu0 %v391
  %416 = vmatpush.msra.mxu0 %v389
  %417 = vmatmul.f32.gmra.mxu0 %v198
  %v418 = vpop.f32.mrf.mxu0
  %v419 = vadd.f32 0.0, %v418
  %420 = vdwg.mxu0
  %421 = vmatpush.msra.mxu0 0.0
  %422 = vmatpush.msra.mxu0 0.0
  %423 = vmatpush.msra.mxu0 0.0
  %424 = vmatpush.msra.mxu0 0.0
  %425 = vmatpush.msra.mxu0 0.0
  %426 = vmatpush.msra.mxu0 0.0
  %427 = vmatpush.msra.mxu0 0.0
  %428 = vmatpush.msra.mxu0 0.0
  %429 = vmatpush.msra.mxu0 0.0
  %430 = vmatpush.msra.mxu0 0.0
  %431 = vmatpush.msra.mxu0 0.0
  %432 = vmatpush.msra.mxu0 0.0
  %433 = vmatpush.msra.mxu0 0.0
  %434 = vmatpush.msra.mxu0 %v394
  %435 = vmatpush.msra.mxu0 %v392
  %436 = vmatpush.msra.mxu0 %v390
  %437 = vmatmul.f32.gmra.mxu0 %v198
  %v438 = vpop.f32.mrf.mxu0
  %v439 = vadd.f32 0.0, %v438
  %440 = vdwg.mxu0
  %v441 = vadd.f32 %v349, %v419
  %v442 = vadd.f32 %v369, %v439
  %vm443 = vcmask 1043456
  %v444 = vsel %vm443, %v240, 0.0
  %v445 = vsel %vm443, %v241, 0.0
  %v446 = vadd.f32 %v444, %v445
  %447 = vadd.xlane.f32.xlu0 %v446
  %v448 = vpop.xlane.xlu0 %447
  %v449 = vadd.f32 %v448, 0.0
  %v450 = vsel %vm443, %v441, 0.0
  %v451 = vsel %vm443, %v442, 0.0
  %v452 = vadd.f32 %v450, %v451
  %453 = vadd.xlane.f32.xlu0 %v452
  %v454 = vpop.xlane.xlu0 %453
  %v455 = vadd.f32 %v449, %v454
  %v456 = vmul.f32 %v455, 0.001953125
  %v457 = vsub.f32 %v240, %v456
  %v458 = vsub.f32 %v241, %v456
  %v459 = vmul.f32 %v457, %v457
  %v460 = vmul.f32 %v458, %v458
  %v461 = vsel %vm443, %v459, 0.0
  %v462 = vsel %vm443, %v460, 0.0
  %v463 = vadd.f32 %v461, %v462
  %464 = vadd.xlane.f32.xlu0 %v463
  %v465 = vpop.xlane.xlu0 %464
  %v466 = vadd.f32 %v465, 0.0
  %v467 = vsub.f32 %v441, %v456
  %v468 = vsub.f32 %v442, %v456
  %v469 = vmul.f32 %v467, %v467
  %v470 = vmul.f32 %v468, %v468
  %v471 = vsel %vm443, %v469, 0.0
  %v472 = vsel %vm443, %v470, 0.0
  %v473 = vadd.f32 %v471, %v472
  %474 = vadd.xlane.f32.xlu0 %v473
  %v475 = vpop.xlane.xlu0 %474
  %v476 = vadd.f32 %v466, %v475
  %v477 = vmul.f32 %v476, 0.001953125
  %v478 = vadd.f32 %v477, 1e-05
  %v479 = vrsqrt.pop %v478
  %v480 = vmul.f32 %v479, %v478
  %v481 = vmul.f32 %v480, %v479
  %v482 = vmul.f32 0.5, %v481
  %v483 = vsub.f32 1.5, %v482
  %v484 = vmul.f32 %v479, %v483
  %vm485 = vweird.f32 %v478
  %vm486 = vweird.f32 %v479
  %vm487 = vmor %vm485, %vm486
  %v488 = vsel %vm487, %v479, %v484
  %v489 = vld [vmem:[%s3] sm:$0xf]
  %v490 = vmul.f32 %v488, %v489
  %v491 = vld [vmem:[%s4] sm:$0xf]
  %493 = vset.pattern.permute.xlu0 0
  %494 = vperm.xlu0 %493, %v490
  %v495 = vpop.permute.xlu0 %494
  %v497 = vmul.f32 %v457, %v495
  %v498 = vmul.f32 %v458, %v495
  %500 = vset.pattern.permute.xlu0 0
  %501 = vperm.xlu0 %500, %v491
  %v502 = vpop.permute.xlu0 %501
  %v504 = vadd.f32 %v497, %v502
  %v505 = vadd.f32 %v498, %v502
  %v506 = vld [vmem:[%s1] sm:$0xff]
  %508 = vst [vmem:[#allocation1] ss:$2 sm:$0xff] %v506
  %v509 = vld.sshfl [vmem:[#allocation1] sm:$0xff pattern:$0x75316420]
  %v510 = vld.sshfl [vmem:[#allocation1 + $0x8] sm:$0xff pattern:$0x75316420]
  %v513 = vadd.f32 %v504, %v509
  %v514 = vadd.f32 %v505, %v510
  %vm515 = vcmp.ge.f32.partialorder %v513, 0.0
  %vm516 = vcmp.ge.f32.partialorder %v514, 0.0
  %v517 = vstv %s24
  %v518 = vmul.f32 %v517, %v513
  %v519 = vmul.f32 %v517, %v514
  %v520 = vsel %vm515, %v513, %v518
  %v521 = vsel %vm516, %v514, %v519
  %v524 = vrot.slane %v521, 4
  %v525 = vsel %vm443, %v520, %v524
  %527 = vst [vmem:[%s6] sm:$0xff] %v525
  %v528 = vmul.f32 %v467, %v495
  %v529 = vmul.f32 %v468, %v495
  %v530 = vadd.f32 %v528, %v502
  %v531 = vadd.f32 %v529, %v502
  %s532 = scalar_lea.vmem %s1, 8
  %v533 = vld [vmem:[%s532] sm:$0xff]
  %535 = vst [vmem:[#allocation1] ss:$2 sm:$0xff] %v533
  %v536 = vld.sshfl [vmem:[#allocation1] sm:$0xff pattern:$0x75316420]
  %v537 = vld.sshfl [vmem:[#allocation1 + $0x8] sm:$0xff pattern:$0x75316420]
  %v540 = vadd.f32 %v530, %v536
  %v541 = vadd.f32 %v531, %v537
  %vm542 = vcmp.ge.f32.partialorder %v540, 0.0
  %vm543 = vcmp.ge.f32.partialorder %v541, 0.0
  %v544 = vmul.f32 %v517, %v540
  %v545 = vmul.f32 %v517, %v541
  %v546 = vsel %vm542, %v540, %v544
  %v547 = vsel %vm543, %v541, %v545
  %v550 = vrot.slane %v547, 4
  %v551 = vsel %vm443, %v546, %v550
  %s553 = scalar_lea.vmem %s6, 8
  %554 = vst [vmem:[%s553] sm:$0xff] %v551
  // Predicated region
  $region26: #{inception_block_forward.3} parent=0 // pred_check
    _
  $region27: #{inception_block_forward.3} parent=0 // pred_check_branch
    %556 = sbr.rel (0) target = $region29
  $region28: #{inception_block_forward.3} parent=0 // pred_region
    _
  $region29: #{inception_block_forward.3} parent=0 // pred_fallthru
    _
  // Predicated region
  $region30: #{inception_block_forward.3} parent=0 // pred_check
    _
  $region31: #{inception_block_forward.3} parent=0 // pred_check_branch
    %558 = sbr.rel (0) target = $region33
  $region32: #{inception_block_forward.3} parent=0 // pred_region
    _
  $region33: #{inception_block_forward.3} parent=0 // pred_fallthru
    _

</llo_original>
